<compile_context>
chip_gen: v5e
topology: v5e:2x2
jax: 0.10.0
libtpu: 0.0.40
codegen_flags: <defaults>
</compile_context>

<pallas_src>
import jax
import jax.numpy as jnp
import numpy as np
from jax import lax
from jax.experimental import pallas as pl
from jax.experimental.pallas import tpu as pltpu

# ---- config consistent with the module ----
N_EMBD = 384            # n_embd in the reference
BLOCK_SIZE = 256        # max context length (tril buffer size)
HEAD_SIZE = 64          # typical head_size = n_embd / n_head (6 heads)
DROPOUT = 0.2           # identity in eval mode


def _head_kernel(x_ref, wq_ref, wkv_ref, mask_ref, o_ref, k_sc, v_sc):
    """Fused single-head causal attention, one (batch, query-row-tile) grid step.

    x_ref:    (1, T, C)  f32   full-sequence activations (resident across qi steps)
    wq_ref:   (C, H)     bf16  query weight with the C**-0.5 scale pre-folded in
    wkv_ref:  (C, 2H)    bf16  fused [Wk | Wv]
    mask_ref: (tq, T)    f32   additive causal mask rows for this query tile (0 / -inf)
    o_ref:    (1, tq, H) f32   output rows for this query tile
    k_sc:     (T, H)     bf16  key projection scratch   (computed once per batch elem)
    v_sc:     (T, H)     bf16  value projection scratch (computed once per batch elem)
    """
    qi = pl.program_id(1)
    tq = o_ref.shape[1]
    H = wq_ref.shape[1]

    # K / V projection over the whole sequence: done once per batch element (qi == 0),
    # kept resident in VMEM scratch across the sequential query-row tiles.
    @pl.when(qi == 0)
    def _():
        x_all = x_ref[0].astype(jnp.bfloat16)                       # (T, C)
        kv = jnp.dot(x_all, wkv_ref[...],
                     preferred_element_type=jnp.float32,
                     precision=lax.Precision.DEFAULT)               # (T, 2H), f32 acc
        k_sc[...] = kv[:, :H].astype(jnp.bfloat16)
        v_sc[...] = kv[:, H:].astype(jnp.bfloat16)

    # Q projection for this tile's rows only (scores scale already folded into Wq).
    row0 = pl.multiple_of(qi * tq, tq)
    x_tile = x_ref[0, pl.ds(row0, tq), :].astype(jnp.bfloat16)      # (tq, C)
    q = jnp.dot(x_tile, wq_ref[...],
                preferred_element_type=jnp.float32,
                precision=lax.Precision.DEFAULT)                    # (tq, H)

    # scores = (q * C**-0.5) @ k^T  -- contraction over last dims, no explicit k.T.
    scores = lax.dot_general(q.astype(jnp.bfloat16), k_sc[...],
                             (((1,), (1,)), ((), ())),
                             preferred_element_type=jnp.float32,
                             precision=lax.Precision.DEFAULT)       # (tq, T)

    # Causal mask: single add of the precomputed 0/-inf rows, then stable f32 softmax.
    scores = scores + mask_ref[...]
    m = jnp.max(scores, axis=-1, keepdims=True)                     # diag unmasked -> finite
    p = jnp.exp(scores - m)
    denom = jnp.sum(p, axis=-1, keepdims=True)
    # EUP approx reciprocal: rows sum to 1 only to ~1e-3 relative (acceptable for inference).
    wei = p * pl.reciprocal(denom, approx=True)

    # dropout on wei: identity in eval mode.
    o_ref[0] = jnp.dot(wei.astype(jnp.bfloat16), v_sc[...],
                       preferred_element_type=jnp.float32,
                       precision=lax.Precision.DEFAULT).astype(o_ref.dtype)


def prepare_head_params(w_q, w_k, w_v):
    """One-time parameter prep (hoisted out of the per-forward path).

    NOTE (intentional quirk): the reference module scales scores by C**-0.5 with
    C = n_embd (=384), NOT head_size**-0.5.  That exact behavior is reproduced by
    folding n_embd**-0.5 into Wq here.  Do NOT "fix" or re-apply this scale elsewhere.
    """
    C = w_q.shape[0]
    wq = (w_q * (C ** -0.5)).astype(jnp.bfloat16)                     # (C, H), scale folded
    wkv = jnp.concatenate([w_k, w_v], axis=1).astype(jnp.bfloat16)    # (C, 2H)
    return wq, wkv


def head_forward(x, wq, wkv, *, tq=128):
    """x: (B, T, C) f32; wq: (C, H) bf16 (scale folded); wkv: (C, 2H) bf16.

    Returns (B, T, H) f32.  Weights must come from prepare_head_params().
    """
    B, T, C = x.shape
    H = wq.shape[1]
    tq = min(tq, T)
    assert T % tq == 0 and tq % 8 == 0, "T must tile into sublane-aligned row tiles"
    nq = T // tq

    # Additive causal mask (0 on/below diagonal, -inf above).  This is the module's
    # `tril` buffer in additive form; it is a compile-time constant under jit.
    rows = lax.broadcasted_iota(jnp.int32, (T, T), 0)
    cols = lax.broadcasted_iota(jnp.int32, (T, T), 1)
    mask = jnp.where(rows >= cols, 0.0, -jnp.inf).astype(jnp.float32)

    return pl.pallas_call(
        _head_kernel,
        out_shape=jax.ShapeDtypeStruct((B, T, H), jnp.float32),
        grid=(B, nq),
        in_specs=[
            # Full sequence resident (K/V need all rows); block index is constant in qi,
            # so Pallas does not re-DMA it across row tiles of the same batch element.
            pl.BlockSpec((1, T, C), lambda b, q: (b, 0, 0)),
            pl.BlockSpec((C, H), lambda b, q: (0, 0)),
            pl.BlockSpec((C, 2 * H), lambda b, q: (0, 0)),
            pl.BlockSpec((tq, T), lambda b, q: (q, 0)),
        ],
        out_specs=pl.BlockSpec((1, tq, H), lambda b, q: (b, q, 0)),
        scratch_shapes=[
            pltpu.VMEM((T, H), jnp.bfloat16),   # K
            pltpu.VMEM((T, H), jnp.bfloat16),   # V
        ],
        compiler_params=pltpu.CompilerParams(
            # B is megacore-parallel; the row-tile axis is sequential because it reuses
            # the per-batch K/V scratch (avoids recomputing the K/V projection per tile).
            dimension_semantics=("parallel", "arbitrary")),
    )(x, wq, wkv, mask)


def head_reference(x, w_q, w_k, w_v):
    """Pure-JAX reference mirroring the PyTorch Head (eval mode), full f32."""
    B, T, C = x.shape
    q = x @ w_q
    k = x @ w_k
    v = x @ w_v
    wei = jnp.einsum("btd,bsd->bts", q, k) * (C ** -0.5)
    tril = jnp.tril(jnp.ones((T, T), dtype=bool))
    wei = jnp.where(tril[None], wei, -jnp.inf)
    wei = jax.nn.softmax(wei, axis=-1)
    return jnp.einsum("bts,bsd->btd", wei, v)


if __name__ == "__main__":
    # Reference matmuls in true f32; the in-kernel dots explicitly request DEFAULT
    # precision on their (bf16) operands, so this only affects the reference path.
    jax.config.update("jax_default_matmul_precision", "highest")

    key = jax.random.PRNGKey(0)
    kx, kq, kk, kv = jax.random.split(key, 4)

    B, T = 2, 256                                  # T == block_size (two query-row tiles)
    C, H = N_EMBD, HEAD_SIZE

    x = jax.random.normal(kx, (B, T, C), dtype=jnp.float32)
    w_scale = C ** -0.5
    w_q = (w_scale * jax.random.normal(kq, (C, H))).astype(jnp.float32)
    w_k = (w_scale * jax.random.normal(kk, (C, H))).astype(jnp.float32)
    w_v = (w_scale * jax.random.normal(kv, (C, H))).astype(jnp.float32)

    # One-time weight prep (scale fold + K/V fuse + bf16 cast), hoisted out of forward.
    wq_p, wkv_p = prepare_head_params(w_q, w_k, w_v)

    fwd = jax.jit(head_forward)
    out = jax.block_until_ready(fwd(x, wq_p, wkv_p))
    assert out.shape == (B, T, H)

    ref = jax.block_until_ready(jax.jit(head_reference)(x, w_q, w_k, w_v))
    # Tolerance sized for bf16 MXU operands (with f32 accumulation) plus the EUP
    # approx-reciprocal in the softmax, compared against a full-f32 "highest" reference.
    np.testing.assert_allclose(np.asarray(out), np.asarray(ref), rtol=2e-2, atol=2e-2)

    print("KERNEL_OK")
</pallas_src>

<mosaic_0001>
module attributes {stable_mosaic.version = 11 : i64} {
  func.func @_head_kernel(%arg0: i32, %arg1: i32, %arg2: memref<1x256x384xf32, #tpu.memory_space<vmem>>, %arg3: memref<384x64xbf16, #tpu.memory_space<vmem>>, %arg4: memref<384x128xbf16, #tpu.memory_space<vmem>>, %arg5: memref<128x256xf32, #tpu.memory_space<vmem>>, %arg6: memref<1x128x64xf32, #tpu.memory_space<vmem>>, %arg7: memref<256x64xbf16, #tpu.memory_space<vmem>>, %arg8: memref<256x64xbf16, #tpu.memory_space<vmem>>) attributes {dimension_semantics = [#tpu.dimension_semantics<parallel>, #tpu.dimension_semantics<arbitrary>], iteration_bounds = array<i64: 2, 2>, scalar_prefetch = 0 : i64, scratch_operands = 2 : i64, tpu.core_type = #tpu.core_type<tc>, window_params = [{transform_indices = @transform_0, window_bounds = array<i64: 1, 256, 384>}, {pipeline_mode = #tpu.pipeline_mode<synchronous>, transform_indices = @transform_1, window_bounds = array<i64: 384, 64>}, {pipeline_mode = #tpu.pipeline_mode<synchronous>, transform_indices = @transform_2, window_bounds = array<i64: 384, 128>}, {transform_indices = @transform_3, window_bounds = array<i64: 128, 256>}, {transform_indices = @transform_4, window_bounds = array<i64: 1, 128, 64>}]} {
    %c0_i32 = arith.constant 0 : i32
    %0 = arith.cmpi eq, %arg1, %c0_i32 : i32
    %1 = arith.extui %0 : i1 to i32
    %c0_i32_0 = arith.constant 0 : i32
    %2 = arith.cmpi ne, %1, %c0_i32_0 : i32
    scf.if %2 {
      %c0_17 = arith.constant 0 : index
      %c0_18 = arith.constant 0 : index
      %c0_19 = arith.constant 0 : index
      %32 = vector.load %arg2[%c0_17, %c0_18, %c0_19] : memref<1x256x384xf32, #tpu.memory_space<vmem>>, vector<1x256x384xf32>
      %33 = vector.shape_cast %32 : vector<1x256x384xf32> to vector<256x384xf32>
      %34 = arith.truncf %33 : vector<256x384xf32> to vector<256x384xbf16>
      %c0_20 = arith.constant 0 : index
      %c0_21 = arith.constant 0 : index
      %35 = vector.load %arg4[%c0_20, %c0_21] : memref<384x128xbf16, #tpu.memory_space<vmem>>, vector<384x128xbf16>
      %cst_22 = arith.constant dense<0.000000e+00> : vector<256x128xf32>
      %36 = tpu.matmul %34, %35, %cst_22 {dimension_numbers = #tpu.dot_dimension_numbers<[1], [0], [0], [1], [0, 0, 1, 1], [], []>} : vector<256x384xbf16>, vector<384x128xbf16>, vector<256x128xf32> -> vector<256x128xf32>
      %37 = vector.extract_strided_slice %36 {offsets = [0, 0], sizes = [256, 64], strides = [1, 1]} : vector<256x128xf32> to vector<256x64xf32>
      %38 = arith.truncf %37 : vector<256x64xf32> to vector<256x64xbf16>
      %c0_23 = arith.constant 0 : index
      %c0_24 = arith.constant 0 : index
      %39 = vector.load %arg7[%c0_23, %c0_24] : memref<256x64xbf16, #tpu.memory_space<vmem>>, vector<256x64xbf16>
      tpu.vector_store %arg7[%c0_23, %c0_24], %38 {strides = array<i32>} : memref<256x64xbf16, #tpu.memory_space<vmem>>, vector<256x64xbf16>,
      %40 = vector.extract_strided_slice %36 {offsets = [0, 64], sizes = [256, 64], strides = [1, 1]} : vector<256x128xf32> to vector<256x64xf32>
      %41 = arith.truncf %40 : vector<256x64xf32> to vector<256x64xbf16>
      %c0_25 = arith.constant 0 : index
      %c0_26 = arith.constant 0 : index
      %42 = vector.load %arg8[%c0_25, %c0_26] : memref<256x64xbf16, #tpu.memory_space<vmem>>, vector<256x64xbf16>
      tpu.vector_store %arg8[%c0_25, %c0_26], %41 {strides = array<i32>} : memref<256x64xbf16, #tpu.memory_space<vmem>>, vector<256x64xbf16>,
    } else {
    }
    %c128_i32 = arith.constant 128 : i32
    %3 = arith.muli %arg1, %c128_i32 : i32
    %4 = tpu.assume_multiple %3, 128 : i32
    %c0 = arith.constant 0 : index
    %5 = arith.index_cast %4 : i32 to index
    %c0_1 = arith.constant 0 : index
    %6 = vector.load %arg2[%c0, %5, %c0_1] : memref<1x256x384xf32, #tpu.memory_space<vmem>>, vector<1x128x384xf32>
    %7 = vector.shape_cast %6 : vector<1x128x384xf32> to vector<128x384xf32>
    %8 = arith.truncf %7 : vector<128x384xf32> to vector<128x384xbf16>
    %c0_2 = arith.constant 0 : index
    %c0_3 = arith.constant 0 : index
    %9 = vector.load %arg3[%c0_2, %c0_3] : memref<384x64xbf16, #tpu.memory_space<vmem>>, vector<384x64xbf16>
    %cst = arith.constant dense<0.000000e+00> : vector<128x64xf32>
    %10 = tpu.matmul %8, %9, %cst {dimension_numbers = #tpu.dot_dimension_numbers<[1], [0], [0], [1], [0, 0, 1, 1], [], []>} : vector<128x384xbf16>, vector<384x64xbf16>, vector<128x64xf32> -> vector<128x64xf32>
    %11 = arith.truncf %10 : vector<128x64xf32> to vector<128x64xbf16>
    %c0_4 = arith.constant 0 : index
    %c0_5 = arith.constant 0 : index
    %12 = vector.load %arg7[%c0_4, %c0_5] : memref<256x64xbf16, #tpu.memory_space<vmem>>, vector<256x64xbf16>
    %cst_6 = arith.constant dense<0.000000e+00> : vector<128x256xf32>
    %13 = tpu.matmul %11, %12, %cst_6 {dimension_numbers = #tpu.dot_dimension_numbers<[1], [1], [0], [0], [0, 0, 1, 0], [], []>} : vector<128x64xbf16>, vector<256x64xbf16>, vector<128x256xf32> -> vector<128x256xf32>
    %c0_7 = arith.constant 0 : index
    %c0_8 = arith.constant 0 : index
    %14 = vector.load %arg5[%c0_7, %c0_8] : memref<128x256xf32, #tpu.memory_space<vmem>>, vector<128x256xf32>
    %15 = arith.addf %13, %14 : vector<128x256xf32>
    %cst_9 = arith.constant dense<0xFF800000> : vector<128xf32>
    %16 = vector.multi_reduction <maximumf>, %15, %cst_9 [1] : vector<128x256xf32> to vector<128xf32>
    %17 = vector.shape_cast %16 : vector<128xf32> to vector<128x1xf32>
    %18 = vector.broadcast %17 : vector<128x1xf32> to vector<128x256xf32>
    %19 = arith.subf %15, %18 : vector<128x256xf32>
    %20 = math.exp %19 : vector<128x256xf32>
    %cst_10 = arith.constant dense<0.000000e+00> : vector<128xf32>
    %21 = vector.multi_reduction <add>, %20, %cst_10 [1] : vector<128x256xf32> to vector<128xf32>
    %22 = vector.shape_cast %21 : vector<128xf32> to vector<128x1xf32>
    %23 = tpu.reciprocal %22 {approx = true} : vector<128x1xf32> -> vector<128x1xf32>
    %24 = vector.broadcast %23 : vector<128x1xf32> to vector<128x256xf32>
    %25 = arith.mulf %20, %24 : vector<128x256xf32>
    %26 = arith.truncf %25 : vector<128x256xf32> to vector<128x256xbf16>
    %c0_11 = arith.constant 0 : index
    %c0_12 = arith.constant 0 : index
    %27 = vector.load %arg8[%c0_11, %c0_12] : memref<256x64xbf16, #tpu.memory_space<vmem>>, vector<256x64xbf16>
    %cst_13 = arith.constant dense<0.000000e+00> : vector<128x64xf32>
    %28 = tpu.matmul %26, %27, %cst_13 {dimension_numbers = #tpu.dot_dimension_numbers<[1], [0], [0], [1], [0, 0, 1, 1], [], []>} : vector<128x256xbf16>, vector<256x64xbf16>, vector<128x64xf32> -> vector<128x64xf32>
    %c0_14 = arith.constant 0 : index
    %c0_15 = arith.constant 0 : index
    %c0_16 = arith.constant 0 : index
    %29 = vector.load %arg6[%c0_14, %c0_15, %c0_16] : memref<1x128x64xf32, #tpu.memory_space<vmem>>, vector<1x128x64xf32>
    %30 = vector.shape_cast %29 : vector<1x128x64xf32> to vector<128x64xf32>
    %31 = vector.shape_cast %28 : vector<128x64xf32> to vector<1x128x64xf32>
    tpu.vector_store %arg6[%c0_14, %c0_15, %c0_16], %31 {strides = array<i32>} : memref<1x128x64xf32, #tpu.memory_space<vmem>>, vector<1x128x64xf32>,
    return
  }
  func.func @transform_0(%arg0: i32, %arg1: i32) -> (i32, i32, i32) {
    %c0_i32 = arith.constant 0 : i32
    %c0_i32_0 = arith.constant 0 : i32
    %c0_i32_1 = arith.constant 0 : i32
    return %arg0, %c0_i32, %c0_i32_0 : i32, i32, i32
  }
  func.func @transform_1(%arg0: i32, %arg1: i32) -> (i32, i32) {
    %c0_i32 = arith.constant 0 : i32
    %c0_i32_0 = arith.constant 0 : i32
    %c0_i32_1 = arith.constant 0 : i32
    return %c0_i32, %c0_i32_0 : i32, i32
  }
  func.func @transform_2(%arg0: i32, %arg1: i32) -> (i32, i32) {
    %c0_i32 = arith.constant 0 : i32
    %c0_i32_0 = arith.constant 0 : i32
    %c0_i32_1 = arith.constant 0 : i32
    return %c0_i32, %c0_i32_0 : i32, i32
  }
  func.func @transform_3(%arg0: i32, %arg1: i32) -> (i32, i32) {
    %c0_i32 = arith.constant 0 : i32
    %c0_i32_0 = arith.constant 0 : i32
    return %arg1, %c0_i32 : i32, i32
  }
  func.func @transform_4(%arg0: i32, %arg1: i32) -> (i32, i32, i32) {
    %c0_i32 = arith.constant 0 : i32
    %c0_i32_0 = arith.constant 0 : i32
    return %arg0, %arg1, %c0_i32 : i32, i32, i32
  }
}

</mosaic_0001>

<llo_original>
// kernel: head_forward.1
$region0: #{head_forward.1}
  #allocation0 [shape = 'u32[]', space=smem, size = 0x4, offset = 0x4, fixed_abs, tag = 'smem constant byte address 0x4 - core index']
  #allocation1 [shape = 'u32[72,128]{1,0:T(1,128)}', space=vmem, size = 0x9000, scoped, tag = 'internal scratch']
  #allocation2 [shape = 'bf16[256,64]{1,0:T(8,128)(2,1)}', space=vmem, size = 0x10000, scoped, tag = 'scratch operand']
  #allocation3 [shape = 'bf16[256,64]{1,0:T(8,128)(2,1)}', space=vmem, size = 0x10000, scoped, tag = 'scratch operand']
  %s0 = inlined_call_operand.hbm [shape: f32[2,256,384], index: 0, kind: input, shape index: {}]
  %s1 = inlined_call_operand.vmem [shape: bf16[384,64], index: 1, kind: input, shape index: {}]
  %s2 = inlined_call_operand.vmem [shape: bf16[384,128], index: 2, kind: input, shape index: {}]
  %s3 = inlined_call_operand.vmem [shape: f32[256,256], index: 3, kind: input, shape index: {}]
  %s4 = inlined_call_operand.vmem [shape: f32[2,256,64], index: 4, kind: output, shape index: {}]
  %s5 = sld [smem:[#allocation0]]
  $region57: #{head_forward.1} parent=0
    _
  %s7 = ssub.s32 1, %s5
  %s8 = scalar_select 0, %s7, %s5
  $region1: #{head_forward.1} parent=0
    #allocation4 [shape = 'u8[786432]{0}', space=vmem, size = 0xc0000, scoped, tag = 'input window, operand 0']
    #allocation5 [shape = 's32[2]{0}', space=sflag, size = 0x8, scoped, tag = 'scoped memory for head_forward.1']
    %9 = vsyncpa [#allocation5], 0
    %s10 = scalar_lea.sflag [#allocation5], 1
    %11 = vsyncpa %s10, 0
    loop: start=0, step=1, limit=6
    $region2: #{head_forward.1} parent=1 // loop_pre_header
      _
    $region3: #{head_forward.1} parent=1 // loop_header
      %s13 = sphi 0, %s17
      %p14 = scmp.ge.s32.totalorder %s13, 6
      %s20 = sphi 0, %s32
      %s21 = sphi 0, %s28
      %s22 = sphi 0, %s20
      %s23 = sphi 0, %s21
      %s24 = sphi 0, %s22
      %s25 = sphi 0, %s23
      %s35 = sphi 0, %s37
      %s38 = sphi 0, %s35
      %s39 = sphi 0, %s38
      %s55 = sphi 0, %s39
      %s59 = sphi 0, %s59
      %s61 = sphi 0, %s59
      %s62 = sphi 0, %s61
      %s76 = sphi 0, %s62
      %s80 = sphi 0, %s80
      %s82 = sphi 0, %s80
      %s83 = sphi 0, %s82
      %s97 = sphi 0, %s83
      %s103 = sphi 0, %s105
      %s106 = sphi 0, %s103
      %s107 = sphi 0, %s106
      %s123 = sphi 0, %s107
      %s131 = sphi 0, %s133
      %s134 = sphi 0, %s131
      %s135 = sphi 0, %s134
      %s151 = sphi 0, %s135
    $region4: #{head_forward.1} parent=1 // loop_header_branch
      %16 = sbr.rel (%p14) target = $region8
    $region5: #{head_forward.1} parent=1 // loop_body
      %s18 = ssub.s32 %s13, 1
      %s19 = ssub.s32 %s13, 2
      %s26 = sadd.s32 1, %s21
      %p27 = scmp.ge.s32.totalorder %s26, 2
      %s28 = scalar_select %p27, 0, %s26
      %s29 = sadd.s32 1, %s20
      %s30 = scalar_select %p27, %s29, %s20
      %p31 = scmp.ge.s32.totalorder %s30, 2
      %s32 = scalar_select %p31, 0, %s30
      %s33 = ssub.s32 %s20, %s32
      %p34 = scmp.eq.s32.totalorder %s33, 0
      %s36 = sadd.s32 %s35, 1
      %s37 = scalar_select %p34, %s35, %s36
      %p40 = pneg %p34
      %p41 = scmp.eq.s32.totalorder %s13, 3
      %p42 = por %p40, %p41
      %p43 = scmp.ne.s32.totalorder %s35, %s38
      %p44 = scmp.eq.s32.totalorder %s13, 0
      %p45 = por %p43, %p44
      %p46 = scmp.ne.s32.totalorder %s35, %s38
      %p47 = scmp.eq.s32.totalorder %s18, 3
      %p48 = por %p46, %p47
      %p49 = scmp.ne.s32.totalorder %s38, %s39
      %p50 = scmp.eq.s32.totalorder %s18, 0
      %p51 = por %p49, %p50
      %p52 = scmp.ne.s32.totalorder %s38, %s39
      %p53 = scmp.eq.s32.totalorder %s19, 3
      %p54 = por %p52, %p53
      %p56 = scmp.ne.s32.totalorder %s39, %s55
      %p57 = scmp.eq.s32.totalorder %s19, 0
      %p58 = por %p56, %p57
      %s60 = sadd.s32 %s59, 1
      %p63 = scmp.eq.s32.totalorder %s13, 3
      %p64 = scmp.ne.s32.totalorder %s59, %s61
      %p65 = scmp.eq.s32.totalorder %s13, 0
      %p66 = por %p64, %p65
      %p67 = scmp.ne.s32.totalorder %s59, %s61
      %p68 = scmp.eq.s32.totalorder %s18, 3
      %p69 = por %p67, %p68
      %p70 = scmp.ne.s32.totalorder %s61, %s62
      %p71 = scmp.eq.s32.totalorder %s18, 0
      %p72 = por %p70, %p71
      %p73 = scmp.ne.s32.totalorder %s61, %s62
      %p74 = scmp.eq.s32.totalorder %s19, 3
      %p75 = por %p73, %p74
      %p77 = scmp.ne.s32.totalorder %s62, %s76
      %p78 = scmp.eq.s32.totalorder %s19, 0
      %p79 = por %p77, %p78
      %s81 = sadd.s32 %s80, 1
      %p84 = scmp.eq.s32.totalorder %s13, 3
      %p85 = scmp.ne.s32.totalorder %s80, %s82
      %p86 = scmp.eq.s32.totalorder %s13, 0
      %p87 = por %p85, %p86
      %p88 = scmp.ne.s32.totalorder %s80, %s82
      %p89 = scmp.eq.s32.totalorder %s18, 3
      %p90 = por %p88, %p89
      %p91 = scmp.ne.s32.totalorder %s82, %s83
      %p92 = scmp.eq.s32.totalorder %s18, 0
      %p93 = por %p91, %p92
      %p94 = scmp.ne.s32.totalorder %s82, %s83
      %p95 = scmp.eq.s32.totalorder %s19, 3
      %p96 = por %p94, %p95
      %p98 = scmp.ne.s32.totalorder %s83, %s97
      %p99 = scmp.eq.s32.totalorder %s19, 0
      %p100 = por %p98, %p99
      %s101 = ssub.s32 %s21, %s28
      %p102 = scmp.eq.s32.totalorder %s101, 0
      %s104 = sadd.s32 %s103, 1
      %s105 = scalar_select %p102, %s103, %s104
      %p108 = pneg %p102
      %p109 = scmp.eq.s32.totalorder %s13, 3
      %p110 = por %p108, %p109
      %p111 = scmp.ne.s32.totalorder %s103, %s106
      %p112 = scmp.eq.s32.totalorder %s13, 0
      %p113 = por %p111, %p112
      %p114 = scmp.ne.s32.totalorder %s103, %s106
      %p115 = scmp.eq.s32.totalorder %s18, 3
      %p116 = por %p114, %p115
      %p117 = scmp.ne.s32.totalorder %s106, %s107
      %p118 = scmp.eq.s32.totalorder %s18, 0
      %p119 = por %p117, %p118
      %p120 = scmp.ne.s32.totalorder %s106, %s107
      %p121 = scmp.eq.s32.totalorder %s19, 3
      %p122 = por %p120, %p121
      %p124 = scmp.ne.s32.totalorder %s107, %s123
      %p125 = scmp.eq.s32.totalorder %s19, 0
      %p126 = por %p124, %p125
      %s127 = ssub.s32 %s20, %s32
      %s128 = ssub.s32 %s21, %s28
      %s129 = sor.u32 %s127, %s128
      %p130 = scmp.eq.s32.totalorder %s129, 0
      %s132 = sadd.s32 %s131, 1
      %s133 = scalar_select %p130, %s131, %s132
      %p136 = pneg %p130
      %p137 = scmp.eq.s32.totalorder %s13, 3
      %p138 = por %p136, %p137
      %p139 = scmp.ne.s32.totalorder %s131, %s134
      %p140 = scmp.eq.s32.totalorder %s13, 0
      %p141 = por %p139, %p140
      %p142 = scmp.ne.s32.totalorder %s131, %s134
      %p143 = scmp.eq.s32.totalorder %s18, 3
      %p144 = por %p142, %p143
      %p145 = scmp.ne.s32.totalorder %s134, %s135
      %p146 = scmp.eq.s32.totalorder %s18, 0
      %p147 = por %p145, %p146
      %p148 = scmp.ne.s32.totalorder %s134, %s135
      %p149 = scmp.eq.s32.totalorder %s19, 3
      %p150 = por %p148, %p149
      %p152 = scmp.ne.s32.totalorder %s135, %s151
      %p153 = scmp.eq.s32.totalorder %s19, 0
      %p154 = por %p152, %p153
      %p155 = scmp.le.s32.totalorder 1, %s13
      %p156 = scmp.lt.s32.totalorder %s13, 5
      %p157 = pnand %p155, %p156
      %p158 = pneg %p157
      // Predicated region
      $region9: #{head_forward.1} parent=5 // pred_check
        _
      $region10: #{head_forward.1} parent=5 // pred_check_branch
        %160 = sbr.rel (%p157) target = $region12
      $region11: #{head_forward.1} parent=5 // pred_region
        %s161 = ssub.s32 %s13, 1
        // Predicated region
        $region13: #{head_forward.1} parent=11 // pred_check
          %p162 = pneg %p72
        $region14: #{head_forward.1} parent=11 // pred_check_branch
          %164 = sbr.rel (%p162) target = $region16
        $region15: #{head_forward.1} parent=11 // pred_region
          _
        $region16: #{head_forward.1} parent=11 // pred_fallthru
          _
        // Predicated region
        $region17: #{head_forward.1} parent=11 // pred_check
          %p165 = pneg %p93
        $region18: #{head_forward.1} parent=11 // pred_check_branch
          %167 = sbr.rel (%p165) target = $region20
        $region19: #{head_forward.1} parent=11 // pred_region
          _
        $region20: #{head_forward.1} parent=11 // pred_fallthru
          _
      $region12: #{head_forward.1} parent=5 // pred_fallthru
        _
      %p168 = scmp.lt.s32.totalorder %s13, 4
      // Predicated region
      $region21: #{head_forward.1} parent=5 // pred_check
        %p169 = pneg %p168
      $region22: #{head_forward.1} parent=5 // pred_check_branch
        %171 = sbr.rel (%p169) target = $region24
      $region23: #{head_forward.1} parent=5 // pred_region
        // Predicated region
        $region25: #{head_forward.1} parent=23 // pred_check
          %p172 = pneg %p45
        $region26: #{head_forward.1} parent=23 // pred_check_branch
          %174 = sbr.rel (%p172) target = $region28
        $region27: #{head_forward.1} parent=23 // pred_region
          %s175 = sand.u32 %s35, 1
          %s176 = scalar_lea.sflag [#allocation5], %s175
          %s177 = sand.u32 %s35, 1
          %s178 = smul.addr %s177, 768
          %s179 = scalar_lea.vmem [#allocation4], %s178
          %181 = vsyncadd %s176, 0
          %s182 = smul.addr %s20, 96
          %s183 = smul.addr %s182, 8
          %s184 = scalar_lea.hbm %s0, %s183
          %s185 = sshll.u32 %s184, 4
          %s186 = int_to_ptr.hbm [resolvable:$true] %s185
          %s187 = sshll.u32 %s179, 4
          %s188 = int_to_ptr.vmem [resolvable:$true] %s187
          %193 = dma.hbm_to_vmem [thread:$0]  %s186, 12288, %s188, %s176, 384, 384, 24
        $region28: #{head_forward.1} parent=23 // pred_fallthru
          _
        // Predicated region
        $region29: #{head_forward.1} parent=23 // pred_check
          %p194 = pneg %p113
        $region30: #{head_forward.1} parent=23 // pred_check_branch
          %196 = sbr.rel (%p194) target = $region32
        $region31: #{head_forward.1} parent=23 // pred_region
          %s197 = smul.u32 16, %s21
          %p198 = scmp.lt.s32.totalorder %s197, 31
          %s199 = scalar_select %p198, %s197, 31
          %s200 = smul.addr %s199, 2
          %s201 = smul.addr %s200, 8
          %s202 = scalar_lea.vmem %s3, %s201
          %s203 = smul.u32 16, %s21
        $region32: #{head_forward.1} parent=23 // pred_fallthru
          _
      $region24: #{head_forward.1} parent=5 // pred_fallthru
        _
      %p204 = scmp.le.s32.totalorder 1, %s13
      %p205 = scmp.lt.s32.totalorder %s13, 5
      %p206 = pnand %p204, %p205
      %p207 = pneg %p206
      // Predicated region
      $region33: #{head_forward.1} parent=5 // pred_check
        _
      $region34: #{head_forward.1} parent=5 // pred_check_branch
        %209 = sbr.rel (%p206) target = $region36
      $region35: #{head_forward.1} parent=5 // pred_region
        %s210 = ssub.s32 %s13, 1
        %s211 = sand.u32 %s38, 1
        %s212 = scalar_lea.sflag [#allocation5], %s211
        %s213 = sand.u32 %s38, 1
        %s214 = smul.addr %s213, 768
        %s215 = scalar_lea.vmem [#allocation4], %s214
        // Predicated region
        $region37: #{head_forward.1} parent=35 // pred_check
          %p216 = pneg %p51
        $region38: #{head_forward.1} parent=35 // pred_check_branch
          %218 = sbr.rel (%p216) target = $region40
        $region39: #{head_forward.1} parent=35 // pred_region
          %220 = dma.done %s212, 12288
        $region40: #{head_forward.1} parent=35 // pred_fallthru
          _
        %s221 = sand.u32 %s38, 1
        %s222 = scalar_lea.sflag [#allocation5], %s221
        %s223 = sand.u32 %s38, 1
        %s224 = smul.addr %s223, 768
        %s225 = scalar_lea.vmem [#allocation4], %s224
        %p226 = pneg %p51
        %p227 = pneg %p48
        %p228 = pneg %p72
        %p229 = pneg %p69
        %p230 = pneg %p93
        %p231 = pneg %p90
        %s232 = smul.u32 16, %s23
        %p233 = scmp.lt.s32.totalorder %s232, 31
        %s234 = scalar_select %p233, %s232, 31
        %s235 = smul.addr %s234, 2
        %s236 = smul.addr %s235, 8
        %s237 = scalar_lea.vmem %s3, %s236
        %p238 = pneg %p119
        %p239 = pneg %p116
        %p240 = pneg %p147
        %p241 = pneg %p144
        %s242 = smul.u32 16, %s23
        %p243 = scmp.lt.s32.totalorder %s22, 1
        %s244 = scalar_select %p243, %s22, 1
        %p245 = scmp.lt.s32.totalorder %s242, 31
        %s246 = scalar_select %p245, %s242, 31
        %s247 = smul.addr %s244, 32
        %s248 = sadd.s32 %s246, %s247
        %s249 = smul.addr %s248, 8
        %s250 = scalar_lea.vmem %s4, %s249
        %s251 = smul.u32 16, %s23
        %p252 = scmp.lt.s32.totalorder %s251, 31
        %s253 = scalar_select %p252, %s251, 31
        %s254 = smul.addr %s253, 2
        %s255 = smul.addr %s254, 8
        %s256 = scalar_lea.vmem %s3, %s255
        %s257 = smul.u32 16, %s23
        %s258 = smul.u32 16, %s23
        %p259 = scmp.lt.s32.totalorder %s22, 1
        %s260 = scalar_select %p259, %s22, 1
        %p261 = scmp.lt.s32.totalorder %s258, 31
        %s262 = scalar_select %p261, %s258, 31
        %s263 = smul.addr %s260, 32
        %s264 = sadd.s32 %s262, %s263
        %s265 = smul.addr %s264, 8
        %s266 = scalar_lea.vmem %s4, %s265
        %s267 = smul.u32 16, %s23
        %p268 = scmp.eq.s32.totalorder %s23, 0
        // Predicated region
        $region41: #{head_forward.1} parent=35 // pred_check
          %p269 = pneg %p268
        $region42: #{head_forward.1} parent=35 // pred_check_branch
          %271 = sbr.rel (%p269) target = $region44
        $region43: #{head_forward.1} parent=35 // pred_region
          %v272 = vld [vmem:[%s215] sm:$0xff]
          %v273 = vld [vmem:[%s215 + $0x8] sm:$0xff]
          %v274 = vld [vmem:[%s215 + $0x10] sm:$0xff]
          %v275 = vld [vmem:[%s215 + $0x18] sm:$0xff]
          %v276 = vld [vmem:[%s215 + $0x20] sm:$0xff]
          %v277 = vld [vmem:[%s215 + $0x28] sm:$0xff]
          %v278 = vld [vmem:[%s215 + $0x30] sm:$0xff]
          %v279 = vld [vmem:[%s215 + $0x38] sm:$0xff]
          %v280 = vld [vmem:[%s215 + $0x40] sm:$0xff]
          %v281 = vld [vmem:[%s215 + $0x48] sm:$0xff]
          %v282 = vld [vmem:[%s215 + $0x50] sm:$0xff]
          %v283 = vld [vmem:[%s215 + $0x58] sm:$0xff]
          %v284 = vld [vmem:[%s215 + $0x60] sm:$0xff]
          %v285 = vld [vmem:[%s215 + $0x68] sm:$0xff]
          %v286 = vld [vmem:[%s215 + $0x70] sm:$0xff]
          %v287 = vld [vmem:[%s215 + $0x78] sm:$0xff]
          %v288 = vld [vmem:[%s215 + $0x80] sm:$0xff]
          %v289 = vld [vmem:[%s215 + $0x88] sm:$0xff]
          %v290 = vld [vmem:[%s215 + $0x90] sm:$0xff]
          %v291 = vld [vmem:[%s215 + $0x98] sm:$0xff]
          %v292 = vld [vmem:[%s215 + $0xa0] sm:$0xff]
          %v293 = vld [vmem:[%s215 + $0xa8] sm:$0xff]
          %v294 = vld [vmem:[%s215 + $0xb0] sm:$0xff]
          %v295 = vld [vmem:[%s215 + $0xb8] sm:$0xff]
          %v296 = vld [vmem:[%s215 + $0xc0] sm:$0xff]
          %v297 = vld [vmem:[%s215 + $0xc8] sm:$0xff]
          %v298 = vld [vmem:[%s215 + $0xd0] sm:$0xff]
          %v299 = vld [vmem:[%s215 + $0xd8] sm:$0xff]
          %v300 = vld [vmem:[%s215 + $0xe0] sm:$0xff]
          %v301 = vld [vmem:[%s215 + $0xe8] sm:$0xff]
          %v302 = vld [vmem:[%s215 + $0xf0] sm:$0xff]
          %v303 = vld [vmem:[%s215 + $0xf8] sm:$0xff]
          %v304 = vld [vmem:[%s215 + $0x100] sm:$0xff]
          %v305 = vld [vmem:[%s215 + $0x108] sm:$0xff]
          %v306 = vld [vmem:[%s215 + $0x110] sm:$0xff]
          %v307 = vld [vmem:[%s215 + $0x118] sm:$0xff]
          %v308 = vld [vmem:[%s215 + $0x120] sm:$0xff]
          %v309 = vld [vmem:[%s215 + $0x128] sm:$0xff]
          %v310 = vld [vmem:[%s215 + $0x130] sm:$0xff]
          %v311 = vld [vmem:[%s215 + $0x138] sm:$0xff]
          %v312 = vld [vmem:[%s215 + $0x140] sm:$0xff]
          %v313 = vld [vmem:[%s215 + $0x148] sm:$0xff]
          %v314 = vld [vmem:[%s215 + $0x150] sm:$0xff]
          %v315 = vld [vmem:[%s215 + $0x158] sm:$0xff]
          %v316 = vld [vmem:[%s215 + $0x160] sm:$0xff]
          %v317 = vld [vmem:[%s215 + $0x168] sm:$0xff]
          %v318 = vld [vmem:[%s215 + $0x170] sm:$0xff]
          %v319 = vld [vmem:[%s215 + $0x178] sm:$0xff]
          %v320 = vld [vmem:[%s215 + $0x180] sm:$0xff]
          %v321 = vld [vmem:[%s215 + $0x188] sm:$0xff]
          %v322 = vld [vmem:[%s215 + $0x190] sm:$0xff]
          %v323 = vld [vmem:[%s215 + $0x198] sm:$0xff]
          %v324 = vld [vmem:[%s215 + $0x1a0] sm:$0xff]
          %v325 = vld [vmem:[%s215 + $0x1a8] sm:$0xff]
          %v326 = vld [vmem:[%s215 + $0x1b0] sm:$0xff]
          %v327 = vld [vmem:[%s215 + $0x1b8] sm:$0xff]
          %v328 = vld [vmem:[%s215 + $0x1c0] sm:$0xff]
          %v329 = vld [vmem:[%s215 + $0x1c8] sm:$0xff]
          %v330 = vld [vmem:[%s215 + $0x1d0] sm:$0xff]
          %v331 = vld [vmem:[%s215 + $0x1d8] sm:$0xff]
          %v332 = vld [vmem:[%s215 + $0x1e0] sm:$0xff]
          %v333 = vld [vmem:[%s215 + $0x1e8] sm:$0xff]
          %v334 = vld [vmem:[%s215 + $0x1f0] sm:$0xff]
          %v335 = vld [vmem:[%s215 + $0x1f8] sm:$0xff]
          %v336 = vld [vmem:[%s215 + $0x200] sm:$0xff]
          %v337 = vld [vmem:[%s215 + $0x208] sm:$0xff]
          %v338 = vld [vmem:[%s215 + $0x210] sm:$0xff]
          %v339 = vld [vmem:[%s215 + $0x218] sm:$0xff]
          %v340 = vld [vmem:[%s215 + $0x220] sm:$0xff]
          %v341 = vld [vmem:[%s215 + $0x228] sm:$0xff]
          %v342 = vld [vmem:[%s215 + $0x230] sm:$0xff]
          %v343 = vld [vmem:[%s215 + $0x238] sm:$0xff]
          %v344 = vld [vmem:[%s215 + $0x240] sm:$0xff]
          %v345 = vld [vmem:[%s215 + $0x248] sm:$0xff]
          %v346 = vld [vmem:[%s215 + $0x250] sm:$0xff]
          %v347 = vld [vmem:[%s215 + $0x258] sm:$0xff]
          %v348 = vld [vmem:[%s215 + $0x260] sm:$0xff]
          %v349 = vld [vmem:[%s215 + $0x268] sm:$0xff]
          %v350 = vld [vmem:[%s215 + $0x270] sm:$0xff]
          %v351 = vld [vmem:[%s215 + $0x278] sm:$0xff]
          %v352 = vld [vmem:[%s215 + $0x280] sm:$0xff]
          %v353 = vld [vmem:[%s215 + $0x288] sm:$0xff]
          %v354 = vld [vmem:[%s215 + $0x290] sm:$0xff]
          %v355 = vld [vmem:[%s215 + $0x298] sm:$0xff]
          %v356 = vld [vmem:[%s215 + $0x2a0] sm:$0xff]
          %v357 = vld [vmem:[%s215 + $0x2a8] sm:$0xff]
          %v358 = vld [vmem:[%s215 + $0x2b0] sm:$0xff]
          %v359 = vld [vmem:[%s215 + $0x2b8] sm:$0xff]
          %v360 = vld [vmem:[%s215 + $0x2c0] sm:$0xff]
          %v361 = vld [vmem:[%s215 + $0x2c8] sm:$0xff]
          %v362 = vld [vmem:[%s215 + $0x2d0] sm:$0xff]
          %v363 = vld [vmem:[%s215 + $0x2d8] sm:$0xff]
          %v364 = vld [vmem:[%s215 + $0x2e0] sm:$0xff]
          %v365 = vld [vmem:[%s215 + $0x2e8] sm:$0xff]
          %v366 = vld [vmem:[%s215 + $0x2f0] sm:$0xff]
          %v367 = vld [vmem:[%s215 + $0x2f8] sm:$0xff]
          %v368 = vpack.c.bf16 %v275, %v272
          %v369 = vpack.c.bf16 %v276, %v273
          %v370 = vpack.c.bf16 %v277, %v274
          %v371 = vpack.c.bf16 %v281, %v278
          %v372 = vpack.c.bf16 %v282, %v279
          %v373 = vpack.c.bf16 %v283, %v280
          %v374 = vpack.c.bf16 %v287, %v284
          %v375 = vpack.c.bf16 %v288, %v285
          %v376 = vpack.c.bf16 %v289, %v286
          %v377 = vpack.c.bf16 %v293, %v290
          %v378 = vpack.c.bf16 %v294, %v291
          %v379 = vpack.c.bf16 %v295, %v292
          %v380 = vpack.c.bf16 %v299, %v296
          %v381 = vpack.c.bf16 %v300, %v297
          %v382 = vpack.c.bf16 %v301, %v298
          %v383 = vpack.c.bf16 %v305, %v302
          %v384 = vpack.c.bf16 %v306, %v303
          %v385 = vpack.c.bf16 %v307, %v304
          %v386 = vpack.c.bf16 %v311, %v308
          %v387 = vpack.c.bf16 %v312, %v309
          %v388 = vpack.c.bf16 %v313, %v310
          %v389 = vpack.c.bf16 %v317, %v314
          %v390 = vpack.c.bf16 %v318, %v315
          %v391 = vpack.c.bf16 %v319, %v316
          %v392 = vpack.c.bf16 %v323, %v320
          %v393 = vpack.c.bf16 %v324, %v321
          %v394 = vpack.c.bf16 %v325, %v322
          %v395 = vpack.c.bf16 %v329, %v326
          %v396 = vpack.c.bf16 %v330, %v327
          %v397 = vpack.c.bf16 %v331, %v328
          %v398 = vpack.c.bf16 %v335, %v332
          %v399 = vpack.c.bf16 %v336, %v333
          %v400 = vpack.c.bf16 %v337, %v334
          %v401 = vpack.c.bf16 %v341, %v338
          %v402 = vpack.c.bf16 %v342, %v339
          %v403 = vpack.c.bf16 %v343, %v340
          %v404 = vpack.c.bf16 %v347, %v344
          %v405 = vpack.c.bf16 %v348, %v345
          %v406 = vpack.c.bf16 %v349, %v346
          %v407 = vpack.c.bf16 %v353, %v350
          %v408 = vpack.c.bf16 %v354, %v351
          %v409 = vpack.c.bf16 %v355, %v352
          %v410 = vpack.c.bf16 %v359, %v356
          %v411 = vpack.c.bf16 %v360, %v357
          %v412 = vpack.c.bf16 %v361, %v358
          %v413 = vpack.c.bf16 %v365, %v362
          %v414 = vpack.c.bf16 %v366, %v363
          %v415 = vpack.c.bf16 %v367, %v364
          %v416 = vld [vmem:[%s2] sm:$0xf]
          %v417 = vld [vmem:[%s2 + $0x4] sm:$0xf]
          %v418 = vld [vmem:[%s2 + $0x8] sm:$0xf]
          %v419 = vld [vmem:[%s2 + $0xc] sm:$0xf]
          %v420 = vld [vmem:[%s2 + $0x10] sm:$0xf]
          %v421 = vld [vmem:[%s2 + $0x14] sm:$0xf]
          %v422 = vld [vmem:[%s2 + $0x18] sm:$0xf]
          %v423 = vld [vmem:[%s2 + $0x1c] sm:$0xf]
          %v424 = vld [vmem:[%s2 + $0x20] sm:$0xf]
          %v425 = vld [vmem:[%s2 + $0x24] sm:$0xf]
          %v426 = vld [vmem:[%s2 + $0x28] sm:$0xf]
          %v427 = vld [vmem:[%s2 + $0x2c] sm:$0xf]
          %v428 = vld [vmem:[%s2 + $0x30] sm:$0xf]
          %v429 = vld [vmem:[%s2 + $0x34] sm:$0xf]
          %v430 = vld [vmem:[%s2 + $0x38] sm:$0xf]
          %v431 = vld [vmem:[%s2 + $0x3c] sm:$0xf]
          %v432 = vld [vmem:[%s2 + $0x40] sm:$0xf]
          %v433 = vld [vmem:[%s2 + $0x44] sm:$0xf]
          %v434 = vld [vmem:[%s2 + $0x48] sm:$0xf]
          %v435 = vld [vmem:[%s2 + $0x4c] sm:$0xf]
          %v436 = vld [vmem:[%s2 + $0x50] sm:$0xf]
          %v437 = vld [vmem:[%s2 + $0x54] sm:$0xf]
          %v438 = vld [vmem:[%s2 + $0x58] sm:$0xf]
          %v439 = vld [vmem:[%s2 + $0x5c] sm:$0xf]
          %v440 = vld [vmem:[%s2 + $0x60] sm:$0xf]
          %v441 = vld [vmem:[%s2 + $0x64] sm:$0xf]
          %v442 = vld [vmem:[%s2 + $0x68] sm:$0xf]
          %v443 = vld [vmem:[%s2 + $0x6c] sm:$0xf]
          %v444 = vld [vmem:[%s2 + $0x70] sm:$0xf]
          %v445 = vld [vmem:[%s2 + $0x74] sm:$0xf]
          %v446 = vld [vmem:[%s2 + $0x78] sm:$0xf]
          %v447 = vld [vmem:[%s2 + $0x7c] sm:$0xf]
          %v448 = vld [vmem:[%s2 + $0x80] sm:$0xf]
          %v449 = vld [vmem:[%s2 + $0x84] sm:$0xf]
          %v450 = vld [vmem:[%s2 + $0x88] sm:$0xf]
          %v451 = vld [vmem:[%s2 + $0x8c] sm:$0xf]
          %v452 = vld [vmem:[%s2 + $0x90] sm:$0xf]
          %v453 = vld [vmem:[%s2 + $0x94] sm:$0xf]
          %v454 = vld [vmem:[%s2 + $0x98] sm:$0xf]
          %v455 = vld [vmem:[%s2 + $0x9c] sm:$0xf]
          %v456 = vld [vmem:[%s2 + $0xa0] sm:$0xf]
          %v457 = vld [vmem:[%s2 + $0xa4] sm:$0xf]
          %v458 = vld [vmem:[%s2 + $0xa8] sm:$0xf]
          %v459 = vld [vmem:[%s2 + $0xac] sm:$0xf]
          %v460 = vld [vmem:[%s2 + $0xb0] sm:$0xf]
          %v461 = vld [vmem:[%s2 + $0xb4] sm:$0xf]
          %v462 = vld [vmem:[%s2 + $0xb8] sm:$0xf]
          %v463 = vld [vmem:[%s2 + $0xbc] sm:$0xf]
          %v512 = vunpack.c.l.b16 %v416
          %v513 = vunpack.c.l.b16 %v417
          %v514 = vunpack.c.l.b16 %v418
          %v515 = vunpack.c.l.b16 %v419
          %v516 = vunpack.c.l.b16 %v420
          %v517 = vunpack.c.l.b16 %v421
          %v518 = vunpack.c.l.b16 %v422
          %v519 = vunpack.c.l.b16 %v423
          %v520 = vunpack.c.l.b16 %v424
          %v521 = vunpack.c.l.b16 %v425
          %v522 = vunpack.c.l.b16 %v426
          %v523 = vunpack.c.l.b16 %v427
          %v524 = vunpack.c.l.b16 %v428
          %v525 = vunpack.c.l.b16 %v429
          %v526 = vunpack.c.l.b16 %v430
          %v527 = vunpack.c.l.b16 %v431
          %v528 = vunpack.c.l.b16 %v432
          %v529 = vunpack.c.l.b16 %v433
          %v530 = vunpack.c.l.b16 %v434
          %v531 = vunpack.c.l.b16 %v435
          %v532 = vunpack.c.l.b16 %v436
          %v533 = vunpack.c.l.b16 %v437
          %v534 = vunpack.c.l.b16 %v438
          %v535 = vunpack.c.l.b16 %v439
          %v536 = vunpack.c.l.b16 %v440
          %v537 = vunpack.c.l.b16 %v441
          %v538 = vunpack.c.l.b16 %v442
          %v539 = vunpack.c.l.b16 %v443
          %v540 = vunpack.c.l.b16 %v444
          %v541 = vunpack.c.l.b16 %v445
          %v542 = vunpack.c.l.b16 %v446
          %v543 = vunpack.c.l.b16 %v447
          %v544 = vunpack.c.l.b16 %v448
          %v545 = vunpack.c.l.b16 %v449
          %v546 = vunpack.c.l.b16 %v450
          %v547 = vunpack.c.l.b16 %v451
          %v548 = vunpack.c.l.b16 %v452
          %v549 = vunpack.c.l.b16 %v453
          %v550 = vunpack.c.l.b16 %v454
          %v551 = vunpack.c.l.b16 %v455
          %v552 = vunpack.c.l.b16 %v456
          %v553 = vunpack.c.l.b16 %v457
          %v554 = vunpack.c.l.b16 %v458
          %v555 = vunpack.c.l.b16 %v459
          %v556 = vunpack.c.l.b16 %v460
          %v557 = vunpack.c.l.b16 %v461
          %v558 = vunpack.c.l.b16 %v462
          %v559 = vunpack.c.l.b16 %v463
          %v560 = vpack.c.b16 %v513, %v512
          %v561 = vpack.c.b16 %v515, %v514
          %v562 = vpack.c.b16 %v517, %v516
          %v563 = vpack.c.b16 %v519, %v518
          %v564 = vpack.c.b16 %v521, %v520
          %v565 = vpack.c.b16 %v523, %v522
          %v566 = vpack.c.b16 %v525, %v524
          %v567 = vpack.c.b16 %v527, %v526
          %v568 = vpack.c.b16 %v529, %v528
          %v569 = vpack.c.b16 %v531, %v530
          %v570 = vpack.c.b16 %v533, %v532
          %v571 = vpack.c.b16 %v535, %v534
          %v572 = vpack.c.b16 %v537, %v536
          %v573 = vpack.c.b16 %v539, %v538
          %v574 = vpack.c.b16 %v541, %v540
          %v575 = vpack.c.b16 %v543, %v542
          %v576 = vpack.c.b16 %v545, %v544
          %v577 = vpack.c.b16 %v547, %v546
          %v578 = vpack.c.b16 %v549, %v548
          %v579 = vpack.c.b16 %v551, %v550
          %v580 = vpack.c.b16 %v553, %v552
          %v581 = vpack.c.b16 %v555, %v554
          %v582 = vpack.c.b16 %v557, %v556
          %v583 = vpack.c.b16 %v559, %v558
          %608 = vmatpush.bf16.msra.mxu0 %v567
          %609 = vmatpush.bf16.msra.mxu0 %v566
          %610 = vmatpush.bf16.msra.mxu0 %v565
          %611 = vmatpush.bf16.msra.mxu0 %v564
          %612 = vmatpush.bf16.msra.mxu0 %v563
          %613 = vmatpush.bf16.msra.mxu0 %v562
          %614 = vmatpush.bf16.msra.mxu0 %v561
          %615 = vmatpush.bf16.msra.mxu0 %v560
          %616 = vmatmul.bf16.gmra.mxu0 %v368
          %v617 = vpop.f32.mrf.mxu0
          %v618 = vadd.f32 0.0, %v617
          %v619 = vpop.f32.mrf.mxu0
          %v620 = vadd.f32 0.0, %v619
          %621 = vmatmul.bf16.gmra.mxu0 %v371
          %v622 = vpop.f32.mrf.mxu0
          %v623 = vadd.f32 0.0, %v622
          %v624 = vpop.f32.mrf.mxu0
          %v625 = vadd.f32 0.0, %v624
          %626 = vmatmul.bf16.gmra.mxu0 %v374
          %v627 = vpop.f32.mrf.mxu0
          %v628 = vadd.f32 0.0, %v627
          %v629 = vpop.f32.mrf.mxu0
          %v630 = vadd.f32 0.0, %v629
          %631 = vmatmul.bf16.gmra.mxu0 %v377
          %v632 = vpop.f32.mrf.mxu0
          %v633 = vadd.f32 0.0, %v632
          %v634 = vpop.f32.mrf.mxu0
          %v635 = vadd.f32 0.0, %v634
          %636 = vmatmul.bf16.gmra.mxu0 %v380
          %v637 = vpop.f32.mrf.mxu0
          %v638 = vadd.f32 0.0, %v637
          %v639 = vpop.f32.mrf.mxu0
          %v640 = vadd.f32 0.0, %v639
          %641 = vmatmul.bf16.gmra.mxu0 %v383
          %v642 = vpop.f32.mrf.mxu0
          %v643 = vadd.f32 0.0, %v642
          %v644 = vpop.f32.mrf.mxu0
          %v645 = vadd.f32 0.0, %v644
          %646 = vmatmul.bf16.gmra.mxu0 %v386
          %v647 = vpop.f32.mrf.mxu0
          %v648 = vadd.f32 0.0, %v647
          %v649 = vpop.f32.mrf.mxu0
          %v650 = vadd.f32 0.0, %v649
          %651 = vmatmul.bf16.gmra.mxu0 %v389
          %v652 = vpop.f32.mrf.mxu0
          %v653 = vadd.f32 0.0, %v652
          %v654 = vpop.f32.mrf.mxu0
          %v655 = vadd.f32 0.0, %v654
          %656 = vmatmul.bf16.gmra.mxu0 %v392
          %v657 = vpop.f32.mrf.mxu0
          %v658 = vadd.f32 0.0, %v657
          %v659 = vpop.f32.mrf.mxu0
          %v660 = vadd.f32 0.0, %v659
          %661 = vmatmul.bf16.gmra.mxu0 %v395
          %v662 = vpop.f32.mrf.mxu0
          %v663 = vadd.f32 0.0, %v662
          %v664 = vpop.f32.mrf.mxu0
          %v665 = vadd.f32 0.0, %v664
          %666 = vmatmul.bf16.gmra.mxu0 %v398
          %v667 = vpop.f32.mrf.mxu0
          %v668 = vadd.f32 0.0, %v667
          %v669 = vpop.f32.mrf.mxu0
          %v670 = vadd.f32 0.0, %v669
          %671 = vmatmul.bf16.gmra.mxu0 %v401
          %v672 = vpop.f32.mrf.mxu0
          %v673 = vadd.f32 0.0, %v672
          %v674 = vpop.f32.mrf.mxu0
          %v675 = vadd.f32 0.0, %v674
          %676 = vmatmul.bf16.gmra.mxu0 %v404
          %v677 = vpop.f32.mrf.mxu0
          %v678 = vadd.f32 0.0, %v677
          %v679 = vpop.f32.mrf.mxu0
          %v680 = vadd.f32 0.0, %v679
          %681 = vmatmul.bf16.gmra.mxu0 %v407
          %v682 = vpop.f32.mrf.mxu0
          %v683 = vadd.f32 0.0, %v682
          %v684 = vpop.f32.mrf.mxu0
          %v685 = vadd.f32 0.0, %v684
          %686 = vmatmul.bf16.gmra.mxu0 %v410
          %v687 = vpop.f32.mrf.mxu0
          %v688 = vadd.f32 0.0, %v687
          %v689 = vpop.f32.mrf.mxu0
          %v690 = vadd.f32 0.0, %v689
          %691 = vmatmul.bf16.gmra.mxu0 %v413
          %v692 = vpop.f32.mrf.mxu0
          %v693 = vadd.f32 0.0, %v692
          %v694 = vpop.f32.mrf.mxu0
          %v695 = vadd.f32 0.0, %v694
          %696 = vdwg.mxu0
          %697 = vmatpush.bf16.msra.mxu0 %v575
          %698 = vmatpush.bf16.msra.mxu0 %v574
          %699 = vmatpush.bf16.msra.mxu0 %v573
          %700 = vmatpush.bf16.msra.mxu0 %v572
          %701 = vmatpush.bf16.msra.mxu0 %v571
          %702 = vmatpush.bf16.msra.mxu0 %v570
          %703 = vmatpush.bf16.msra.mxu0 %v569
          %704 = vmatpush.bf16.msra.mxu0 %v568
          %705 = vmatmul.bf16.gmra.mxu0 %v369
          %v706 = vpop.f32.mrf.mxu0
          %v707 = vadd.f32 %v618, %v706
          %v708 = vpop.f32.mrf.mxu0
          %v709 = vadd.f32 %v620, %v708
          %710 = vmatmul.bf16.gmra.mxu0 %v372
          %v711 = vpop.f32.mrf.mxu0
          %v712 = vadd.f32 %v623, %v711
          %v713 = vpop.f32.mrf.mxu0
          %v714 = vadd.f32 %v625, %v713
          %715 = vmatmul.bf16.gmra.mxu0 %v375
          %v716 = vpop.f32.mrf.mxu0
          %v717 = vadd.f32 %v628, %v716
          %v718 = vpop.f32.mrf.mxu0
          %v719 = vadd.f32 %v630, %v718
          %720 = vmatmul.bf16.gmra.mxu0 %v378
          %v721 = vpop.f32.mrf.mxu0
          %v722 = vadd.f32 %v633, %v721
          %v723 = vpop.f32.mrf.mxu0
          %v724 = vadd.f32 %v635, %v723
          %725 = vmatmul.bf16.gmra.mxu0 %v381
          %v726 = vpop.f32.mrf.mxu0
          %v727 = vadd.f32 %v638, %v726
          %v728 = vpop.f32.mrf.mxu0
          %v729 = vadd.f32 %v640, %v728
          %730 = vmatmul.bf16.gmra.mxu0 %v384
          %v731 = vpop.f32.mrf.mxu0
          %v732 = vadd.f32 %v643, %v731
          %v733 = vpop.f32.mrf.mxu0
          %v734 = vadd.f32 %v645, %v733
          %735 = vmatmul.bf16.gmra.mxu0 %v387
          %v736 = vpop.f32.mrf.mxu0
          %v737 = vadd.f32 %v648, %v736
          %v738 = vpop.f32.mrf.mxu0
          %v739 = vadd.f32 %v650, %v738
          %740 = vmatmul.bf16.gmra.mxu0 %v390
          %v741 = vpop.f32.mrf.mxu0
          %v742 = vadd.f32 %v653, %v741
          %v743 = vpop.f32.mrf.mxu0
          %v744 = vadd.f32 %v655, %v743
          %745 = vmatmul.bf16.gmra.mxu0 %v393
          %v746 = vpop.f32.mrf.mxu0
          %v747 = vadd.f32 %v658, %v746
          %v748 = vpop.f32.mrf.mxu0
          %v749 = vadd.f32 %v660, %v748
          %750 = vmatmul.bf16.gmra.mxu0 %v396
          %v751 = vpop.f32.mrf.mxu0
          %v752 = vadd.f32 %v663, %v751
          %v753 = vpop.f32.mrf.mxu0
          %v754 = vadd.f32 %v665, %v753
          %755 = vmatmul.bf16.gmra.mxu0 %v399
          %v756 = vpop.f32.mrf.mxu0
          %v757 = vadd.f32 %v668, %v756
          %v758 = vpop.f32.mrf.mxu0
          %v759 = vadd.f32 %v670, %v758
          %760 = vmatmul.bf16.gmra.mxu0 %v402
          %v761 = vpop.f32.mrf.mxu0
          %v762 = vadd.f32 %v673, %v761
          %v763 = vpop.f32.mrf.mxu0
          %v764 = vadd.f32 %v675, %v763
          %765 = vmatmul.bf16.gmra.mxu0 %v405
          %v766 = vpop.f32.mrf.mxu0
          %v767 = vadd.f32 %v678, %v766
          %v768 = vpop.f32.mrf.mxu0
          %v769 = vadd.f32 %v680, %v768
          %770 = vmatmul.bf16.gmra.mxu0 %v408
          %v771 = vpop.f32.mrf.mxu0
          %v772 = vadd.f32 %v683, %v771
          %v773 = vpop.f32.mrf.mxu0
          %v774 = vadd.f32 %v685, %v773
          %775 = vmatmul.bf16.gmra.mxu0 %v411
          %v776 = vpop.f32.mrf.mxu0
          %v777 = vadd.f32 %v688, %v776
          %v778 = vpop.f32.mrf.mxu0
          %v779 = vadd.f32 %v690, %v778
          %780 = vmatmul.bf16.gmra.mxu0 %v414
          %v781 = vpop.f32.mrf.mxu0
          %v782 = vadd.f32 %v693, %v781
          %v783 = vpop.f32.mrf.mxu0
          %v784 = vadd.f32 %v695, %v783
          %785 = vdwg.mxu0
          %786 = vmatpush.bf16.msra.mxu0 %v583
          %787 = vmatpush.bf16.msra.mxu0 %v582
          %788 = vmatpush.bf16.msra.mxu0 %v581
          %789 = vmatpush.bf16.msra.mxu0 %v580
          %790 = vmatpush.bf16.msra.mxu0 %v579
          %791 = vmatpush.bf16.msra.mxu0 %v578
          %792 = vmatpush.bf16.msra.mxu0 %v577
          %793 = vmatpush.bf16.msra.mxu0 %v576
          %794 = vmatmul.bf16.gmra.mxu0 %v370
          %v795 = vpop.f32.mrf.mxu0
          %v796 = vadd.f32 %v707, %v795
          %v797 = vpop.f32.mrf.mxu0
          %v798 = vadd.f32 %v709, %v797
          %799 = vmatmul.bf16.gmra.mxu0 %v373
          %v800 = vpop.f32.mrf.mxu0
          %v801 = vadd.f32 %v712, %v800
          %v802 = vpop.f32.mrf.mxu0
          %v803 = vadd.f32 %v714, %v802
          %804 = vmatmul.bf16.gmra.mxu0 %v376
          %v805 = vpop.f32.mrf.mxu0
          %v806 = vadd.f32 %v717, %v805
          %v807 = vpop.f32.mrf.mxu0
          %v808 = vadd.f32 %v719, %v807
          %809 = vmatmul.bf16.gmra.mxu0 %v379
          %v810 = vpop.f32.mrf.mxu0
          %v811 = vadd.f32 %v722, %v810
          %v812 = vpop.f32.mrf.mxu0
          %v813 = vadd.f32 %v724, %v812
          %814 = vmatmul.bf16.gmra.mxu0 %v382
          %v815 = vpop.f32.mrf.mxu0
          %v816 = vadd.f32 %v727, %v815
          %v817 = vpop.f32.mrf.mxu0
          %v818 = vadd.f32 %v729, %v817
          %819 = vmatmul.bf16.gmra.mxu0 %v385
          %v820 = vpop.f32.mrf.mxu0
          %v821 = vadd.f32 %v732, %v820
          %v822 = vpop.f32.mrf.mxu0
          %v823 = vadd.f32 %v734, %v822
          %824 = vmatmul.bf16.gmra.mxu0 %v388
          %v825 = vpop.f32.mrf.mxu0
          %v826 = vadd.f32 %v737, %v825
          %v827 = vpop.f32.mrf.mxu0
          %v828 = vadd.f32 %v739, %v827
          %829 = vmatmul.bf16.gmra.mxu0 %v391
          %v830 = vpop.f32.mrf.mxu0
          %v831 = vadd.f32 %v742, %v830
          %v832 = vpop.f32.mrf.mxu0
          %v833 = vadd.f32 %v744, %v832
          %834 = vmatmul.bf16.gmra.mxu0 %v394
          %v835 = vpop.f32.mrf.mxu0
          %v836 = vadd.f32 %v747, %v835
          %v837 = vpop.f32.mrf.mxu0
          %v838 = vadd.f32 %v749, %v837
          %839 = vmatmul.bf16.gmra.mxu0 %v397
          %v840 = vpop.f32.mrf.mxu0
          %v841 = vadd.f32 %v752, %v840
          %v842 = vpop.f32.mrf.mxu0
          %v843 = vadd.f32 %v754, %v842
          %844 = vmatmul.bf16.gmra.mxu0 %v400
          %v845 = vpop.f32.mrf.mxu0
          %v846 = vadd.f32 %v757, %v845
          %v847 = vpop.f32.mrf.mxu0
          %v848 = vadd.f32 %v759, %v847
          %849 = vmatmul.bf16.gmra.mxu0 %v403
          %v850 = vpop.f32.mrf.mxu0
          %v851 = vadd.f32 %v762, %v850
          %v852 = vpop.f32.mrf.mxu0
          %v853 = vadd.f32 %v764, %v852
          %854 = vmatmul.bf16.gmra.mxu0 %v406
          %v855 = vpop.f32.mrf.mxu0
          %v856 = vadd.f32 %v767, %v855
          %v857 = vpop.f32.mrf.mxu0
          %v858 = vadd.f32 %v769, %v857
          %859 = vmatmul.bf16.gmra.mxu0 %v409
          %v860 = vpop.f32.mrf.mxu0
          %v861 = vadd.f32 %v772, %v860
          %v862 = vpop.f32.mrf.mxu0
          %v863 = vadd.f32 %v774, %v862
          %864 = vmatmul.bf16.gmra.mxu0 %v412
          %v865 = vpop.f32.mrf.mxu0
          %v866 = vadd.f32 %v777, %v865
          %v867 = vpop.f32.mrf.mxu0
          %v868 = vadd.f32 %v779, %v867
          %869 = vmatmul.bf16.gmra.mxu0 %v415
          %v870 = vpop.f32.mrf.mxu0
          %v871 = vadd.f32 %v782, %v870
          %v872 = vpop.f32.mrf.mxu0
          %v873 = vadd.f32 %v784, %v872
          %874 = vdwg.mxu0
          %v875 = vpack.c.bf16 %v796, %v796
          %v876 = vpack.c.bf16 %v798, %v798
          %v877 = vpack.c.bf16 %v801, %v801
          %v878 = vpack.c.bf16 %v803, %v803
          %v879 = vpack.c.bf16 %v806, %v806
          %v880 = vpack.c.bf16 %v808, %v808
          %v881 = vpack.c.bf16 %v811, %v811
          %v882 = vpack.c.bf16 %v813, %v813
          %v883 = vpack.c.bf16 %v816, %v816
          %v884 = vpack.c.bf16 %v818, %v818
          %v885 = vpack.c.bf16 %v821, %v821
          %v886 = vpack.c.bf16 %v823, %v823
          %v887 = vpack.c.bf16 %v826, %v826
          %v888 = vpack.c.bf16 %v828, %v828
          %v889 = vpack.c.bf16 %v831, %v831
          %v890 = vpack.c.bf16 %v833, %v833
          %v891 = vpack.c.bf16 %v836, %v836
          %v892 = vpack.c.bf16 %v838, %v838
          %v893 = vpack.c.bf16 %v841, %v841
          %v894 = vpack.c.bf16 %v843, %v843
          %v895 = vpack.c.bf16 %v846, %v846
          %v896 = vpack.c.bf16 %v848, %v848
          %v897 = vpack.c.bf16 %v851, %v851
          %v898 = vpack.c.bf16 %v853, %v853
          %v899 = vpack.c.bf16 %v856, %v856
          %v900 = vpack.c.bf16 %v858, %v858
          %v901 = vpack.c.bf16 %v861, %v861
          %v902 = vpack.c.bf16 %v863, %v863
          %v903 = vpack.c.bf16 %v866, %v866
          %v904 = vpack.c.bf16 %v868, %v868
          %v905 = vpack.c.bf16 %v871, %v871
          %v906 = vpack.c.bf16 %v873, %v873
          %vm907 = vcmask 519168
          %908 = vst.msk [vmem:[#allocation2] sm:$0xf] %vm907, %v875
          %909 = vst.msk [vmem:[#allocation2 + $0x4] sm:$0xf] %vm907, %v876
          %910 = vst.msk [vmem:[#allocation2 + $0x8] sm:$0xf] %vm907, %v877
          %911 = vst.msk [vmem:[#allocation2 + $0xc] sm:$0xf] %vm907, %v878
          %912 = vst.msk [vmem:[#allocation2 + $0x10] sm:$0xf] %vm907, %v879
          %913 = vst.msk [vmem:[#allocation2 + $0x14] sm:$0xf] %vm907, %v880
          %914 = vst.msk [vmem:[#allocation2 + $0x18] sm:$0xf] %vm907, %v881
          %915 = vst.msk [vmem:[#allocation2 + $0x1c] sm:$0xf] %vm907, %v882
          %916 = vst.msk [vmem:[#allocation2 + $0x20] sm:$0xf] %vm907, %v883
          %917 = vst.msk [vmem:[#allocation2 + $0x24] sm:$0xf] %vm907, %v884
          %918 = vst.msk [vmem:[#allocation2 + $0x28] sm:$0xf] %vm907, %v885
          %919 = vst.msk [vmem:[#allocation2 + $0x2c] sm:$0xf] %vm907, %v886
          %920 = vst.msk [vmem:[#allocation2 + $0x30] sm:$0xf] %vm907, %v887
          %921 = vst.msk [vmem:[#allocation2 + $0x34] sm:$0xf] %vm907, %v888
          %922 = vst.msk [vmem:[#allocation2 + $0x38] sm:$0xf] %vm907, %v889
          %923 = vst.msk [vmem:[#allocation2 + $0x3c] sm:$0xf] %vm907, %v890
          %924 = vst.msk [vmem:[#allocation2 + $0x40] sm:$0xf] %vm907, %v891
          %925 = vst.msk [vmem:[#allocation2 + $0x44] sm:$0xf] %vm907, %v892
          %926 = vst.msk [vmem:[#allocation2 + $0x48] sm:$0xf] %vm907, %v893
          %927 = vst.msk [vmem:[#allocation2 + $0x4c] sm:$0xf] %vm907, %v894
          %928 = vst.msk [vmem:[#allocation2 + $0x50] sm:$0xf] %vm907, %v895
          %929 = vst.msk [vmem:[#allocation2 + $0x54] sm:$0xf] %vm907, %v896
          %930 = vst.msk [vmem:[#allocation2 + $0x58] sm:$0xf] %vm907, %v897
          %931 = vst.msk [vmem:[#allocation2 + $0x5c] sm:$0xf] %vm907, %v898
          %932 = vst.msk [vmem:[#allocation2 + $0x60] sm:$0xf] %vm907, %v899
          %933 = vst.msk [vmem:[#allocation2 + $0x64] sm:$0xf] %vm907, %v900
          %934 = vst.msk [vmem:[#allocation2 + $0x68] sm:$0xf] %vm907, %v901
          %935 = vst.msk [vmem:[#allocation2 + $0x6c] sm:$0xf] %vm907, %v902
          %936 = vst.msk [vmem:[#allocation2 + $0x70] sm:$0xf] %vm907, %v903
          %937 = vst.msk [vmem:[#allocation2 + $0x74] sm:$0xf] %vm907, %v904
          %938 = vst.msk [vmem:[#allocation2 + $0x78] sm:$0xf] %vm907, %v905
          %939 = vst.msk [vmem:[#allocation2 + $0x7c] sm:$0xf] %vm907, %v906
          %972 = vrot.lane.b32.xlu0 %v875, 64
          %v973 = vpop.permute.xlu0 %972
          %974 = vrot.lane.b32.xlu0 %v876, 64
          %v975 = vpop.permute.xlu0 %974
          %976 = vrot.lane.b32.xlu0 %v877, 64
          %v977 = vpop.permute.xlu0 %976
          %978 = vrot.lane.b32.xlu0 %v878, 64
          %v979 = vpop.permute.xlu0 %978
          %980 = vrot.lane.b32.xlu0 %v879, 64
          %v981 = vpop.permute.xlu0 %980
          %982 = vrot.lane.b32.xlu0 %v880, 64
          %v983 = vpop.permute.xlu0 %982
          %984 = vrot.lane.b32.xlu0 %v881, 64
          %v985 = vpop.permute.xlu0 %984
          %986 = vrot.lane.b32.xlu0 %v882, 64
          %v987 = vpop.permute.xlu0 %986
          %988 = vrot.lane.b32.xlu0 %v883, 64
          %v989 = vpop.permute.xlu0 %988
          %990 = vrot.lane.b32.xlu0 %v884, 64
          %v991 = vpop.permute.xlu0 %990
          %992 = vrot.lane.b32.xlu0 %v885, 64
          %v993 = vpop.permute.xlu0 %992
          %994 = vrot.lane.b32.xlu0 %v886, 64
          %v995 = vpop.permute.xlu0 %994
          %996 = vrot.lane.b32.xlu0 %v887, 64
          %v997 = vpop.permute.xlu0 %996
          %998 = vrot.lane.b32.xlu0 %v888, 64
          %v999 = vpop.permute.xlu0 %998
          %1000 = vrot.lane.b32.xlu0 %v889, 64
          %v1001 = vpop.permute.xlu0 %1000
          %1002 = vrot.lane.b32.xlu0 %v890, 64
          %v1003 = vpop.permute.xlu0 %1002
          %1004 = vrot.lane.b32.xlu0 %v891, 64
          %v1005 = vpop.permute.xlu0 %1004
          %1006 = vrot.lane.b32.xlu0 %v892, 64
          %v1007 = vpop.permute.xlu0 %1006
          %1008 = vrot.lane.b32.xlu0 %v893, 64
          %v1009 = vpop.permute.xlu0 %1008
          %1010 = vrot.lane.b32.xlu0 %v894, 64
          %v1011 = vpop.permute.xlu0 %1010
          %1012 = vrot.lane.b32.xlu0 %v895, 64
          %v1013 = vpop.permute.xlu0 %1012
          %1014 = vrot.lane.b32.xlu0 %v896, 64
          %v1015 = vpop.permute.xlu0 %1014
          %1016 = vrot.lane.b32.xlu0 %v897, 64
          %v1017 = vpop.permute.xlu0 %1016
          %1018 = vrot.lane.b32.xlu0 %v898, 64
          %v1019 = vpop.permute.xlu0 %1018
          %1020 = vrot.lane.b32.xlu0 %v899, 64
          %v1021 = vpop.permute.xlu0 %1020
          %1022 = vrot.lane.b32.xlu0 %v900, 64
          %v1023 = vpop.permute.xlu0 %1022
          %1024 = vrot.lane.b32.xlu0 %v901, 64
          %v1025 = vpop.permute.xlu0 %1024
          %1026 = vrot.lane.b32.xlu0 %v902, 64
          %v1027 = vpop.permute.xlu0 %1026
          %1028 = vrot.lane.b32.xlu0 %v903, 64
          %v1029 = vpop.permute.xlu0 %1028
          %1030 = vrot.lane.b32.xlu0 %v904, 64
          %v1031 = vpop.permute.xlu0 %1030
          %1032 = vrot.lane.b32.xlu0 %v905, 64
          %v1033 = vpop.permute.xlu0 %1032
          %1034 = vrot.lane.b32.xlu0 %v906, 64
          %v1035 = vpop.permute.xlu0 %1034
          %1068 = vst.msk [vmem:[#allocation3] sm:$0xf] %vm907, %v973
          %1069 = vst.msk [vmem:[#allocation3 + $0x4] sm:$0xf] %vm907, %v975
          %1070 = vst.msk [vmem:[#allocation3 + $0x8] sm:$0xf] %vm907, %v977
          %1071 = vst.msk [vmem:[#allocation3 + $0xc] sm:$0xf] %vm907, %v979
          %1072 = vst.msk [vmem:[#allocation3 + $0x10] sm:$0xf] %vm907, %v981
          %1073 = vst.msk [vmem:[#allocation3 + $0x14] sm:$0xf] %vm907, %v983
          %1074 = vst.msk [vmem:[#allocation3 + $0x18] sm:$0xf] %vm907, %v985
          %1075 = vst.msk [vmem:[#allocation3 + $0x1c] sm:$0xf] %vm907, %v987
          %1076 = vst.msk [vmem:[#allocation3 + $0x20] sm:$0xf] %vm907, %v989
          %1077 = vst.msk [vmem:[#allocation3 + $0x24] sm:$0xf] %vm907, %v991
          %1078 = vst.msk [vmem:[#allocation3 + $0x28] sm:$0xf] %vm907, %v993
          %1079 = vst.msk [vmem:[#allocation3 + $0x2c] sm:$0xf] %vm907, %v995
          %1080 = vst.msk [vmem:[#allocation3 + $0x30] sm:$0xf] %vm907, %v997
          %1081 = vst.msk [vmem:[#allocation3 + $0x34] sm:$0xf] %vm907, %v999
          %1082 = vst.msk [vmem:[#allocation3 + $0x38] sm:$0xf] %vm907, %v1001
          %1083 = vst.msk [vmem:[#allocation3 + $0x3c] sm:$0xf] %vm907, %v1003
          %1084 = vst.msk [vmem:[#allocation3 + $0x40] sm:$0xf] %vm907, %v1005
          %1085 = vst.msk [vmem:[#allocation3 + $0x44] sm:$0xf] %vm907, %v1007
          %1086 = vst.msk [vmem:[#allocation3 + $0x48] sm:$0xf] %vm907, %v1009
          %1087 = vst.msk [vmem:[#allocation3 + $0x4c] sm:$0xf] %vm907, %v1011
          %1088 = vst.msk [vmem:[#allocation3 + $0x50] sm:$0xf] %vm907, %v1013
          %1089 = vst.msk [vmem:[#allocation3 + $0x54] sm:$0xf] %vm907, %v1015
          %1090 = vst.msk [vmem:[#allocation3 + $0x58] sm:$0xf] %vm907, %v1017
          %1091 = vst.msk [vmem:[#allocation3 + $0x5c] sm:$0xf] %vm907, %v1019
          %1092 = vst.msk [vmem:[#allocation3 + $0x60] sm:$0xf] %vm907, %v1021
          %1093 = vst.msk [vmem:[#allocation3 + $0x64] sm:$0xf] %vm907, %v1023
          %1094 = vst.msk [vmem:[#allocation3 + $0x68] sm:$0xf] %vm907, %v1025
          %1095 = vst.msk [vmem:[#allocation3 + $0x6c] sm:$0xf] %vm907, %v1027
          %1096 = vst.msk [vmem:[#allocation3 + $0x70] sm:$0xf] %vm907, %v1029
          %1097 = vst.msk [vmem:[#allocation3 + $0x74] sm:$0xf] %vm907, %v1031
          %1098 = vst.msk [vmem:[#allocation3 + $0x78] sm:$0xf] %vm907, %v1033
          %1099 = vst.msk [vmem:[#allocation3 + $0x7c] sm:$0xf] %vm907, %v1035
        $region44: #{head_forward.1} parent=35 // pred_fallthru
          _
        %s1100 = smul.u32 %s23, 128
        %s1101 = sshra.s32 %s1100, 3
        %s1102 = sand.u32 %s1100, 7
        %s1103 = smul.u32 %s1101, 3
        %s1104 = smul.addr %s1103, 8
        %s1105 = scalar_lea.vmem %s215, %s1104 [#allocation4]
        %v1106 = vld [vmem:[%s1105] sm:$0xff]
        %v1107 = vld [vmem:[%s1105 + $0x8] sm:$0xff]
        %v1108 = vld [vmem:[%s1105 + $0x10] sm:$0xff]
        %v1109 = vld [vmem:[%s1105 + $0x18] sm:$0xff]
        %v1110 = vld [vmem:[%s1105 + $0x20] sm:$0xff]
        %v1111 = vld [vmem:[%s1105 + $0x28] sm:$0xff]
        %v1112 = vld [vmem:[%s1105 + $0x30] sm:$0xff]
        %v1113 = vld [vmem:[%s1105 + $0x38] sm:$0xff]
        %v1114 = vld [vmem:[%s1105 + $0x40] sm:$0xff]
        %v1115 = vld [vmem:[%s1105 + $0x48] sm:$0xff]
        %v1116 = vld [vmem:[%s1105 + $0x50] sm:$0xff]
        %v1117 = vld [vmem:[%s1105 + $0x58] sm:$0xff]
        %v1118 = vld [vmem:[%s1105 + $0x60] sm:$0xff]
        %v1119 = vld [vmem:[%s1105 + $0x68] sm:$0xff]
        %v1120 = vld [vmem:[%s1105 + $0x70] sm:$0xff]
        %v1121 = vld [vmem:[%s1105 + $0x78] sm:$0xff]
        %v1122 = vld [vmem:[%s1105 + $0x80] sm:$0xff]
        %v1123 = vld [vmem:[%s1105 + $0x88] sm:$0xff]
        %v1124 = vld [vmem:[%s1105 + $0x90] sm:$0xff]
        %v1125 = vld [vmem:[%s1105 + $0x98] sm:$0xff]
        %v1126 = vld [vmem:[%s1105 + $0xa0] sm:$0xff]
        %v1127 = vld [vmem:[%s1105 + $0xa8] sm:$0xff]
        %v1128 = vld [vmem:[%s1105 + $0xb0] sm:$0xff]
        %v1129 = vld [vmem:[%s1105 + $0xb8] sm:$0xff]
        %v1130 = vld [vmem:[%s1105 + $0xc0] sm:$0xff]
        %v1131 = vld [vmem:[%s1105 + $0xc8] sm:$0xff]
        %v1132 = vld [vmem:[%s1105 + $0xd0] sm:$0xff]
        %v1133 = vld [vmem:[%s1105 + $0xd8] sm:$0xff]
        %v1134 = vld [vmem:[%s1105 + $0xe0] sm:$0xff]
        %v1135 = vld [vmem:[%s1105 + $0xe8] sm:$0xff]
        %v1136 = vld [vmem:[%s1105 + $0xf0] sm:$0xff]
        %v1137 = vld [vmem:[%s1105 + $0xf8] sm:$0xff]
        %v1138 = vld [vmem:[%s1105 + $0x100] sm:$0xff]
        %v1139 = vld [vmem:[%s1105 + $0x108] sm:$0xff]
        %v1140 = vld [vmem:[%s1105 + $0x110] sm:$0xff]
        %v1141 = vld [vmem:[%s1105 + $0x118] sm:$0xff]
        %v1142 = vld [vmem:[%s1105 + $0x120] sm:$0xff]
        %v1143 = vld [vmem:[%s1105 + $0x128] sm:$0xff]
        %v1144 = vld [vmem:[%s1105 + $0x130] sm:$0xff]
        %v1145 = vld [vmem:[%s1105 + $0x138] sm:$0xff]
        %v1146 = vld [vmem:[%s1105 + $0x140] sm:$0xff]
        %v1147 = vld [vmem:[%s1105 + $0x148] sm:$0xff]
        %v1148 = vld [vmem:[%s1105 + $0x150] sm:$0xff]
        %v1149 = vld [vmem:[%s1105 + $0x158] sm:$0xff]
        %v1150 = vld [vmem:[%s1105 + $0x160] sm:$0xff]
        %v1151 = vld [vmem:[%s1105 + $0x168] sm:$0xff]
        %v1152 = vld [vmem:[%s1105 + $0x170] sm:$0xff]
        %v1153 = vld [vmem:[%s1105 + $0x178] sm:$0xff]
        %v1154 = vpack.c.bf16 %v1109, %v1106
        %v1155 = vpack.c.bf16 %v1110, %v1107
        %v1156 = vpack.c.bf16 %v1111, %v1108
        %v1157 = vpack.c.bf16 %v1115, %v1112
        %v1158 = vpack.c.bf16 %v1116, %v1113
        %v1159 = vpack.c.bf16 %v1117, %v1114
        %v1160 = vpack.c.bf16 %v1121, %v1118
        %v1161 = vpack.c.bf16 %v1122, %v1119
        %v1162 = vpack.c.bf16 %v1123, %v1120
        %v1163 = vpack.c.bf16 %v1127, %v1124
        %v1164 = vpack.c.bf16 %v1128, %v1125
        %v1165 = vpack.c.bf16 %v1129, %v1126
        %v1166 = vpack.c.bf16 %v1133, %v1130
        %v1167 = vpack.c.bf16 %v1134, %v1131
        %v1168 = vpack.c.bf16 %v1135, %v1132
        %v1169 = vpack.c.bf16 %v1139, %v1136
        %v1170 = vpack.c.bf16 %v1140, %v1137
        %v1171 = vpack.c.bf16 %v1141, %v1138
        %v1172 = vpack.c.bf16 %v1145, %v1142
        %v1173 = vpack.c.bf16 %v1146, %v1143
        %v1174 = vpack.c.bf16 %v1147, %v1144
        %v1175 = vpack.c.bf16 %v1151, %v1148
        %v1176 = vpack.c.bf16 %v1152, %v1149
        %v1177 = vpack.c.bf16 %v1153, %v1150
        %v1178 = vld [vmem:[%s1] sm:$0xf]
        %v1179 = vld [vmem:[%s1 + $0x4] sm:$0xf]
        %v1180 = vld [vmem:[%s1 + $0x8] sm:$0xf]
        %v1181 = vld [vmem:[%s1 + $0xc] sm:$0xf]
        %v1182 = vld [vmem:[%s1 + $0x10] sm:$0xf]
        %v1183 = vld [vmem:[%s1 + $0x14] sm:$0xf]
        %v1184 = vld [vmem:[%s1 + $0x18] sm:$0xf]
        %v1185 = vld [vmem:[%s1 + $0x1c] sm:$0xf]
        %v1186 = vld [vmem:[%s1 + $0x20] sm:$0xf]
        %v1187 = vld [vmem:[%s1 + $0x24] sm:$0xf]
        %v1188 = vld [vmem:[%s1 + $0x28] sm:$0xf]
        %v1189 = vld [vmem:[%s1 + $0x2c] sm:$0xf]
        %v1190 = vld [vmem:[%s1 + $0x30] sm:$0xf]
        %v1191 = vld [vmem:[%s1 + $0x34] sm:$0xf]
        %v1192 = vld [vmem:[%s1 + $0x38] sm:$0xf]
        %v1193 = vld [vmem:[%s1 + $0x3c] sm:$0xf]
        %v1194 = vld [vmem:[%s1 + $0x40] sm:$0xf]
        %v1195 = vld [vmem:[%s1 + $0x44] sm:$0xf]
        %v1196 = vld [vmem:[%s1 + $0x48] sm:$0xf]
        %v1197 = vld [vmem:[%s1 + $0x4c] sm:$0xf]
        %v1198 = vld [vmem:[%s1 + $0x50] sm:$0xf]
        %v1199 = vld [vmem:[%s1 + $0x54] sm:$0xf]
        %v1200 = vld [vmem:[%s1 + $0x58] sm:$0xf]
        %v1201 = vld [vmem:[%s1 + $0x5c] sm:$0xf]
        %v1202 = vld [vmem:[%s1 + $0x60] sm:$0xf]
        %v1203 = vld [vmem:[%s1 + $0x64] sm:$0xf]
        %v1204 = vld [vmem:[%s1 + $0x68] sm:$0xf]
        %v1205 = vld [vmem:[%s1 + $0x6c] sm:$0xf]
        %v1206 = vld [vmem:[%s1 + $0x70] sm:$0xf]
        %v1207 = vld [vmem:[%s1 + $0x74] sm:$0xf]
        %v1208 = vld [vmem:[%s1 + $0x78] sm:$0xf]
        %v1209 = vld [vmem:[%s1 + $0x7c] sm:$0xf]
        %v1210 = vld [vmem:[%s1 + $0x80] sm:$0xf]
        %v1211 = vld [vmem:[%s1 + $0x84] sm:$0xf]
        %v1212 = vld [vmem:[%s1 + $0x88] sm:$0xf]
        %v1213 = vld [vmem:[%s1 + $0x8c] sm:$0xf]
        %v1214 = vld [vmem:[%s1 + $0x90] sm:$0xf]
        %v1215 = vld [vmem:[%s1 + $0x94] sm:$0xf]
        %v1216 = vld [vmem:[%s1 + $0x98] sm:$0xf]
        %v1217 = vld [vmem:[%s1 + $0x9c] sm:$0xf]
        %v1218 = vld [vmem:[%s1 + $0xa0] sm:$0xf]
        %v1219 = vld [vmem:[%s1 + $0xa4] sm:$0xf]
        %v1220 = vld [vmem:[%s1 + $0xa8] sm:$0xf]
        %v1221 = vld [vmem:[%s1 + $0xac] sm:$0xf]
        %v1222 = vld [vmem:[%s1 + $0xb0] sm:$0xf]
        %v1223 = vld [vmem:[%s1 + $0xb4] sm:$0xf]
        %v1224 = vld [vmem:[%s1 + $0xb8] sm:$0xf]
        %v1225 = vld [vmem:[%s1 + $0xbc] sm:$0xf]
        %v1274 = vunpack.c.l.b16 %v1178
        %v1275 = vunpack.c.l.b16 %v1179
        %v1276 = vunpack.c.l.b16 %v1180
        %v1277 = vunpack.c.l.b16 %v1181
        %v1278 = vunpack.c.l.b16 %v1182
        %v1279 = vunpack.c.l.b16 %v1183
        %v1280 = vunpack.c.l.b16 %v1184
        %v1281 = vunpack.c.l.b16 %v1185
        %v1282 = vunpack.c.l.b16 %v1186
        %v1283 = vunpack.c.l.b16 %v1187
        %v1284 = vunpack.c.l.b16 %v1188
        %v1285 = vunpack.c.l.b16 %v1189
        %v1286 = vunpack.c.l.b16 %v1190
        %v1287 = vunpack.c.l.b16 %v1191
        %v1288 = vunpack.c.l.b16 %v1192
        %v1289 = vunpack.c.l.b16 %v1193
        %v1290 = vunpack.c.l.b16 %v1194
        %v1291 = vunpack.c.l.b16 %v1195
        %v1292 = vunpack.c.l.b16 %v1196
        %v1293 = vunpack.c.l.b16 %v1197
        %v1294 = vunpack.c.l.b16 %v1198
        %v1295 = vunpack.c.l.b16 %v1199
        %v1296 = vunpack.c.l.b16 %v1200
        %v1297 = vunpack.c.l.b16 %v1201
        %v1298 = vunpack.c.l.b16 %v1202
        %v1299 = vunpack.c.l.b16 %v1203
        %v1300 = vunpack.c.l.b16 %v1204
        %v1301 = vunpack.c.l.b16 %v1205
        %v1302 = vunpack.c.l.b16 %v1206
        %v1303 = vunpack.c.l.b16 %v1207
        %v1304 = vunpack.c.l.b16 %v1208
        %v1305 = vunpack.c.l.b16 %v1209
        %v1306 = vunpack.c.l.b16 %v1210
        %v1307 = vunpack.c.l.b16 %v1211
        %v1308 = vunpack.c.l.b16 %v1212
        %v1309 = vunpack.c.l.b16 %v1213
        %v1310 = vunpack.c.l.b16 %v1214
        %v1311 = vunpack.c.l.b16 %v1215
        %v1312 = vunpack.c.l.b16 %v1216
        %v1313 = vunpack.c.l.b16 %v1217
        %v1314 = vunpack.c.l.b16 %v1218
        %v1315 = vunpack.c.l.b16 %v1219
        %v1316 = vunpack.c.l.b16 %v1220
        %v1317 = vunpack.c.l.b16 %v1221
        %v1318 = vunpack.c.l.b16 %v1222
        %v1319 = vunpack.c.l.b16 %v1223
        %v1320 = vunpack.c.l.b16 %v1224
        %v1321 = vunpack.c.l.b16 %v1225
        %v1322 = vpack.c.b16 %v1275, %v1274
        %v1323 = vpack.c.b16 %v1277, %v1276
        %v1324 = vpack.c.b16 %v1279, %v1278
        %v1325 = vpack.c.b16 %v1281, %v1280
        %v1326 = vpack.c.b16 %v1283, %v1282
        %v1327 = vpack.c.b16 %v1285, %v1284
        %v1328 = vpack.c.b16 %v1287, %v1286
        %v1329 = vpack.c.b16 %v1289, %v1288
        %v1330 = vpack.c.b16 %v1291, %v1290
        %v1331 = vpack.c.b16 %v1293, %v1292
        %v1332 = vpack.c.b16 %v1295, %v1294
        %v1333 = vpack.c.b16 %v1297, %v1296
        %v1334 = vpack.c.b16 %v1299, %v1298
        %v1335 = vpack.c.b16 %v1301, %v1300
        %v1336 = vpack.c.b16 %v1303, %v1302
        %v1337 = vpack.c.b16 %v1305, %v1304
        %v1338 = vpack.c.b16 %v1307, %v1306
        %v1339 = vpack.c.b16 %v1309, %v1308
        %v1340 = vpack.c.b16 %v1311, %v1310
        %v1341 = vpack.c.b16 %v1313, %v1312
        %v1342 = vpack.c.b16 %v1315, %v1314
        %v1343 = vpack.c.b16 %v1317, %v1316
        %v1344 = vpack.c.b16 %v1319, %v1318
        %v1345 = vpack.c.b16 %v1321, %v1320
        %1370 = vmatpush.bf16.msra.mxu0 %v1329
        %1371 = vmatpush.bf16.msra.mxu0 %v1328
        %1372 = vmatpush.bf16.msra.mxu0 %v1327
        %1373 = vmatpush.bf16.msra.mxu0 %v1326
        %1374 = vmatpush.bf16.msra.mxu0 %v1325
        %1375 = vmatpush.bf16.msra.mxu0 %v1324
        %1376 = vmatpush.bf16.msra.mxu0 %v1323
        %1377 = vmatpush.bf16.msra.mxu0 %v1322
        %1378 = vmatmul.bf16.gmra.mxu0 %v1154
        %v1379 = vpop.f32.mrf.mxu0
        %v1380 = vadd.f32 0.0, %v1379
        %v1381 = vpop.f32.mrf.mxu0
        %v1382 = vadd.f32 0.0, %v1381
        %1383 = vmatmul.bf16.gmra.mxu0 %v1157
        %v1384 = vpop.f32.mrf.mxu0
        %v1385 = vadd.f32 0.0, %v1384
        %v1386 = vpop.f32.mrf.mxu0
        %v1387 = vadd.f32 0.0, %v1386
        %1388 = vmatmul.bf16.gmra.mxu0 %v1160
        %v1389 = vpop.f32.mrf.mxu0
        %v1390 = vadd.f32 0.0, %v1389
        %v1391 = vpop.f32.mrf.mxu0
        %v1392 = vadd.f32 0.0, %v1391
        %1393 = vmatmul.bf16.gmra.mxu0 %v1163
        %v1394 = vpop.f32.mrf.mxu0
        %v1395 = vadd.f32 0.0, %v1394
        %v1396 = vpop.f32.mrf.mxu0
        %v1397 = vadd.f32 0.0, %v1396
        %1398 = vmatmul.bf16.gmra.mxu0 %v1166
        %v1399 = vpop.f32.mrf.mxu0
        %v1400 = vadd.f32 0.0, %v1399
        %v1401 = vpop.f32.mrf.mxu0
        %v1402 = vadd.f32 0.0, %v1401
        %1403 = vmatmul.bf16.gmra.mxu0 %v1169
        %v1404 = vpop.f32.mrf.mxu0
        %v1405 = vadd.f32 0.0, %v1404
        %v1406 = vpop.f32.mrf.mxu0
        %v1407 = vadd.f32 0.0, %v1406
        %1408 = vmatmul.bf16.gmra.mxu0 %v1172
        %v1409 = vpop.f32.mrf.mxu0
        %v1410 = vadd.f32 0.0, %v1409
        %v1411 = vpop.f32.mrf.mxu0
        %v1412 = vadd.f32 0.0, %v1411
        %1413 = vmatmul.bf16.gmra.mxu0 %v1175
        %v1414 = vpop.f32.mrf.mxu0
        %v1415 = vadd.f32 0.0, %v1414
        %v1416 = vpop.f32.mrf.mxu0
        %v1417 = vadd.f32 0.0, %v1416
        %1418 = vdwg.mxu0
        %1419 = vmatpush.bf16.msra.mxu0 %v1337
        %1420 = vmatpush.bf16.msra.mxu0 %v1336
        %1421 = vmatpush.bf16.msra.mxu0 %v1335
        %1422 = vmatpush.bf16.msra.mxu0 %v1334
        %1423 = vmatpush.bf16.msra.mxu0 %v1333
        %1424 = vmatpush.bf16.msra.mxu0 %v1332
        %1425 = vmatpush.bf16.msra.mxu0 %v1331
        %1426 = vmatpush.bf16.msra.mxu0 %v1330
        %1427 = vmatmul.bf16.gmra.mxu0 %v1155
        %v1428 = vpop.f32.mrf.mxu0
        %v1429 = vadd.f32 %v1380, %v1428
        %v1430 = vpop.f32.mrf.mxu0
        %v1431 = vadd.f32 %v1382, %v1430
        %1432 = vmatmul.bf16.gmra.mxu0 %v1158
        %v1433 = vpop.f32.mrf.mxu0
        %v1434 = vadd.f32 %v1385, %v1433
        %v1435 = vpop.f32.mrf.mxu0
        %v1436 = vadd.f32 %v1387, %v1435
        %1437 = vmatmul.bf16.gmra.mxu0 %v1161
        %v1438 = vpop.f32.mrf.mxu0
        %v1439 = vadd.f32 %v1390, %v1438
        %v1440 = vpop.f32.mrf.mxu0
        %v1441 = vadd.f32 %v1392, %v1440
        %1442 = vmatmul.bf16.gmra.mxu0 %v1164
        %v1443 = vpop.f32.mrf.mxu0
        %v1444 = vadd.f32 %v1395, %v1443
        %v1445 = vpop.f32.mrf.mxu0
        %v1446 = vadd.f32 %v1397, %v1445
        %1447 = vmatmul.bf16.gmra.mxu0 %v1167
        %v1448 = vpop.f32.mrf.mxu0
        %v1449 = vadd.f32 %v1400, %v1448
        %v1450 = vpop.f32.mrf.mxu0
        %v1451 = vadd.f32 %v1402, %v1450
        %1452 = vmatmul.bf16.gmra.mxu0 %v1170
        %v1453 = vpop.f32.mrf.mxu0
        %v1454 = vadd.f32 %v1405, %v1453
        %v1455 = vpop.f32.mrf.mxu0
        %v1456 = vadd.f32 %v1407, %v1455
        %1457 = vmatmul.bf16.gmra.mxu0 %v1173
        %v1458 = vpop.f32.mrf.mxu0
        %v1459 = vadd.f32 %v1410, %v1458
        %v1460 = vpop.f32.mrf.mxu0
        %v1461 = vadd.f32 %v1412, %v1460
        %1462 = vmatmul.bf16.gmra.mxu0 %v1176
        %v1463 = vpop.f32.mrf.mxu0
        %v1464 = vadd.f32 %v1415, %v1463
        %v1465 = vpop.f32.mrf.mxu0
        %v1466 = vadd.f32 %v1417, %v1465
        %1467 = vdwg.mxu0
        %1468 = vmatpush.bf16.msra.mxu0 %v1345
        %1469 = vmatpush.bf16.msra.mxu0 %v1344
        %1470 = vmatpush.bf16.msra.mxu0 %v1343
        %1471 = vmatpush.bf16.msra.mxu0 %v1342
        %1472 = vmatpush.bf16.msra.mxu0 %v1341
        %1473 = vmatpush.bf16.msra.mxu0 %v1340
        %1474 = vmatpush.bf16.msra.mxu0 %v1339
        %1475 = vmatpush.bf16.msra.mxu0 %v1338
        %1476 = vmatmul.bf16.gmra.mxu0 %v1156
        %v1477 = vpop.f32.mrf.mxu0
        %v1478 = vadd.f32 %v1429, %v1477
        %v1479 = vpop.f32.mrf.mxu0
        %v1480 = vadd.f32 %v1431, %v1479
        %1481 = vmatmul.bf16.gmra.mxu0 %v1159
        %v1482 = vpop.f32.mrf.mxu0
        %v1483 = vadd.f32 %v1434, %v1482
        %v1484 = vpop.f32.mrf.mxu0
        %v1485 = vadd.f32 %v1436, %v1484
        %1486 = vmatmul.bf16.gmra.mxu0 %v1162
        %v1487 = vpop.f32.mrf.mxu0
        %v1488 = vadd.f32 %v1439, %v1487
        %v1489 = vpop.f32.mrf.mxu0
        %v1490 = vadd.f32 %v1441, %v1489
        %1491 = vmatmul.bf16.gmra.mxu0 %v1165
        %v1492 = vpop.f32.mrf.mxu0
        %v1493 = vadd.f32 %v1444, %v1492
        %v1494 = vpop.f32.mrf.mxu0
        %v1495 = vadd.f32 %v1446, %v1494
        %1496 = vmatmul.bf16.gmra.mxu0 %v1168
        %v1497 = vpop.f32.mrf.mxu0
        %v1498 = vadd.f32 %v1449, %v1497
        %v1499 = vpop.f32.mrf.mxu0
        %v1500 = vadd.f32 %v1451, %v1499
        %1501 = vmatmul.bf16.gmra.mxu0 %v1171
        %v1502 = vpop.f32.mrf.mxu0
        %v1503 = vadd.f32 %v1454, %v1502
        %v1504 = vpop.f32.mrf.mxu0
        %v1505 = vadd.f32 %v1456, %v1504
        %1506 = vmatmul.bf16.gmra.mxu0 %v1174
        %v1507 = vpop.f32.mrf.mxu0
        %v1508 = vadd.f32 %v1459, %v1507
        %v1509 = vpop.f32.mrf.mxu0
        %v1510 = vadd.f32 %v1461, %v1509
        %1511 = vmatmul.bf16.gmra.mxu0 %v1177
        %v1512 = vpop.f32.mrf.mxu0
        %v1513 = vadd.f32 %v1464, %v1512
        %v1514 = vpop.f32.mrf.mxu0
        %v1515 = vadd.f32 %v1466, %v1514
        %1516 = vdwg.mxu0
        %v1517 = vpack.c.bf16 %v1480, %v1478
        %v1518 = vpack.c.bf16 %v1485, %v1483
        %v1519 = vpack.c.bf16 %v1490, %v1488
        %v1520 = vpack.c.bf16 %v1495, %v1493
        %v1521 = vpack.c.bf16 %v1500, %v1498
        %v1522 = vpack.c.bf16 %v1505, %v1503
        %v1523 = vpack.c.bf16 %v1510, %v1508
        %v1524 = vpack.c.bf16 %v1515, %v1513
        %v1525 = vld [vmem:[#allocation2] sm:$0xf]
        %v1526 = vld [vmem:[#allocation2 + $0x4] sm:$0xf]
        %v1527 = vld [vmem:[#allocation2 + $0x8] sm:$0xf]
        %v1528 = vld [vmem:[#allocation2 + $0xc] sm:$0xf]
        %v1529 = vld [vmem:[#allocation2 + $0x10] sm:$0xf]
        %v1530 = vld [vmem:[#allocation2 + $0x14] sm:$0xf]
        %v1531 = vld [vmem:[#allocation2 + $0x18] sm:$0xf]
        %v1532 = vld [vmem:[#allocation2 + $0x1c] sm:$0xf]
        %v1533 = vld [vmem:[#allocation2 + $0x20] sm:$0xf]
        %v1534 = vld [vmem:[#allocation2 + $0x24] sm:$0xf]
        %v1535 = vld [vmem:[#allocation2 + $0x28] sm:$0xf]
        %v1536 = vld [vmem:[#allocation2 + $0x2c] sm:$0xf]
        %v1537 = vld [vmem:[#allocation2 + $0x30] sm:$0xf]
        %v1538 = vld [vmem:[#allocation2 + $0x34] sm:$0xf]
        %v1539 = vld [vmem:[#allocation2 + $0x38] sm:$0xf]
        %v1540 = vld [vmem:[#allocation2 + $0x3c] sm:$0xf]
        %v1541 = vld [vmem:[#allocation2 + $0x40] sm:$0xf]
        %v1542 = vld [vmem:[#allocation2 + $0x44] sm:$0xf]
        %v1543 = vld [vmem:[#allocation2 + $0x48] sm:$0xf]
        %v1544 = vld [vmem:[#allocation2 + $0x4c] sm:$0xf]
        %v1545 = vld [vmem:[#allocation2 + $0x50] sm:$0xf]
        %v1546 = vld [vmem:[#allocation2 + $0x54] sm:$0xf]
        %v1547 = vld [vmem:[#allocation2 + $0x58] sm:$0xf]
        %v1548 = vld [vmem:[#allocation2 + $0x5c] sm:$0xf]
        %v1549 = vld [vmem:[#allocation2 + $0x60] sm:$0xf]
        %v1550 = vld [vmem:[#allocation2 + $0x64] sm:$0xf]
        %v1551 = vld [vmem:[#allocation2 + $0x68] sm:$0xf]
        %v1552 = vld [vmem:[#allocation2 + $0x6c] sm:$0xf]
        %v1553 = vld [vmem:[#allocation2 + $0x70] sm:$0xf]
        %v1554 = vld [vmem:[#allocation2 + $0x74] sm:$0xf]
        %v1555 = vld [vmem:[#allocation2 + $0x78] sm:$0xf]
        %v1556 = vld [vmem:[#allocation2 + $0x7c] sm:$0xf]
        %v1557 = vld [vmem:[%s256] sm:$0xff]
        %v1558 = vld [vmem:[%s256 + $0x8] sm:$0xff]
        %v1559 = vld [vmem:[%s256 + $0x10] sm:$0xff]
        %v1560 = vld [vmem:[%s256 + $0x18] sm:$0xff]
        %v1561 = vld [vmem:[%s256 + $0x20] sm:$0xff]
        %v1562 = vld [vmem:[%s256 + $0x28] sm:$0xff]
        %v1563 = vld [vmem:[%s256 + $0x30] sm:$0xff]
        %v1564 = vld [vmem:[%s256 + $0x38] sm:$0xff]
        %v1565 = vld [vmem:[%s256 + $0x40] sm:$0xff]
        %v1566 = vld [vmem:[%s256 + $0x48] sm:$0xff]
        %v1567 = vld [vmem:[%s256 + $0x50] sm:$0xff]
        %v1568 = vld [vmem:[%s256 + $0x58] sm:$0xff]
        %v1569 = vld [vmem:[%s256 + $0x60] sm:$0xff]
        %v1570 = vld [vmem:[%s256 + $0x68] sm:$0xff]
        %v1571 = vld [vmem:[%s256 + $0x70] sm:$0xff]
        %v1572 = vld [vmem:[%s256 + $0x78] sm:$0xff]
        %v1573 = vld [vmem:[%s256 + $0x80] sm:$0xff]
        %v1574 = vld [vmem:[%s256 + $0x88] sm:$0xff]
        %v1575 = vld [vmem:[%s256 + $0x90] sm:$0xff]
        %v1576 = vld [vmem:[%s256 + $0x98] sm:$0xff]
        %v1577 = vld [vmem:[%s256 + $0xa0] sm:$0xff]
        %v1578 = vld [vmem:[%s256 + $0xa8] sm:$0xff]
        %v1579 = vld [vmem:[%s256 + $0xb0] sm:$0xff]
        %v1580 = vld [vmem:[%s256 + $0xb8] sm:$0xff]
        %v1581 = vld [vmem:[%s256 + $0xc0] sm:$0xff]
        %v1582 = vld [vmem:[%s256 + $0xc8] sm:$0xff]
        %v1583 = vld [vmem:[%s256 + $0xd0] sm:$0xff]
        %v1584 = vld [vmem:[%s256 + $0xd8] sm:$0xff]
        %v1585 = vld [vmem:[%s256 + $0xe0] sm:$0xff]
        %v1586 = vld [vmem:[%s256 + $0xe8] sm:$0xff]
        %v1587 = vld [vmem:[%s256 + $0xf0] sm:$0xff]
        %v1588 = vld [vmem:[%s256 + $0xf8] sm:$0xff]
        %v1621 = vunpack.c.l.b16 %v1525
        %v1622 = vunpack.c.l.b16 %v1526
        %v1623 = vunpack.c.l.b16 %v1527
        %v1624 = vunpack.c.l.b16 %v1528
        %v1625 = vunpack.c.l.b16 %v1529
        %v1626 = vunpack.c.l.b16 %v1530
        %v1627 = vunpack.c.l.b16 %v1531
        %v1628 = vunpack.c.l.b16 %v1532
        %v1629 = vunpack.c.l.b16 %v1533
        %v1630 = vunpack.c.l.b16 %v1534
        %v1631 = vunpack.c.l.b16 %v1535
        %v1632 = vunpack.c.l.b16 %v1536
        %v1633 = vunpack.c.l.b16 %v1537
        %v1634 = vunpack.c.l.b16 %v1538
        %v1635 = vunpack.c.l.b16 %v1539
        %v1636 = vunpack.c.l.b16 %v1540
        %v1637 = vunpack.c.l.b16 %v1541
        %v1638 = vunpack.c.l.b16 %v1542
        %v1639 = vunpack.c.l.b16 %v1543
        %v1640 = vunpack.c.l.b16 %v1544
        %v1641 = vunpack.c.l.b16 %v1545
        %v1642 = vunpack.c.l.b16 %v1546
        %v1643 = vunpack.c.l.b16 %v1547
        %v1644 = vunpack.c.l.b16 %v1548
        %v1645 = vunpack.c.l.b16 %v1549
        %v1646 = vunpack.c.l.b16 %v1550
        %v1647 = vunpack.c.l.b16 %v1551
        %v1648 = vunpack.c.l.b16 %v1552
        %v1649 = vunpack.c.l.b16 %v1553
        %v1650 = vunpack.c.l.b16 %v1554
        %v1651 = vunpack.c.l.b16 %v1555
        %v1652 = vunpack.c.l.b16 %v1556
        %v1653 = vpack.c.b16 %v1622, %v1621
        %v1654 = vpack.c.b16 %v1624, %v1623
        %v1655 = vpack.c.b16 %v1626, %v1625
        %v1656 = vpack.c.b16 %v1628, %v1627
        %v1657 = vpack.c.b16 %v1630, %v1629
        %v1658 = vpack.c.b16 %v1632, %v1631
        %v1659 = vpack.c.b16 %v1634, %v1633
        %v1660 = vpack.c.b16 %v1636, %v1635
        %v1661 = vpack.c.b16 %v1638, %v1637
        %v1662 = vpack.c.b16 %v1640, %v1639
        %v1663 = vpack.c.b16 %v1642, %v1641
        %v1664 = vpack.c.b16 %v1644, %v1643
        %v1665 = vpack.c.b16 %v1646, %v1645
        %v1666 = vpack.c.b16 %v1648, %v1647
        %v1667 = vpack.c.b16 %v1650, %v1649
        %v1668 = vpack.c.b16 %v1652, %v1651
        %vm1669 = vcmask 523264
        %v1671 = vsel %vm1669, %v1517, 0
        %v1674 = vsel %vm1669, %v1518, 0
        %v1677 = vsel %vm1669, %v1519, 0
        %v1680 = vsel %vm1669, %v1520, 0
        %v1683 = vsel %vm1669, %v1521, 0
        %v1686 = vsel %vm1669, %v1522, 0
        %v1689 = vsel %vm1669, %v1523, 0
        %v1692 = vsel %vm1669, %v1524, 0
        %v1695 = vsel %vm1669, %v1653, 0
        %v1698 = vsel %vm1669, %v1654, 0
        %v1701 = vsel %vm1669, %v1655, 0
        %v1704 = vsel %vm1669, %v1656, 0
        %v1707 = vsel %vm1669, %v1657, 0
        %v1710 = vsel %vm1669, %v1658, 0
        %v1713 = vsel %vm1669, %v1659, 0
        %v1716 = vsel %vm1669, %v1660, 0
        %v1719 = vsel %vm1669, %v1661, 0
        %v1722 = vsel %vm1669, %v1662, 0
        %v1725 = vsel %vm1669, %v1663, 0
        %v1728 = vsel %vm1669, %v1664, 0
        %v1731 = vsel %vm1669, %v1665, 0
        %v1734 = vsel %vm1669, %v1666, 0
        %v1737 = vsel %vm1669, %v1667, 0
        %v1740 = vsel %vm1669, %v1668, 0
        %1742 = vmatpush.bf16.xpose.msra.mxu0 %v1716
        %1743 = vmatpush.bf16.xpose.msra.mxu0 %v1713
        %1744 = vmatpush.bf16.xpose.msra.mxu0 %v1710
        %1745 = vmatpush.bf16.xpose.msra.mxu0 %v1707
        %1746 = vmatpush.bf16.xpose.msra.mxu0 %v1704
        %1747 = vmatpush.bf16.xpose.msra.mxu0 %v1701
        %1748 = vmatpush.bf16.xpose.msra.mxu0 %v1698
        %1749 = vmatpush.bf16.xpose.msra.mxu0 %v1695
        %1750 = vmatmul.bf16.gmra.mxu0 %v1671
        %v1751 = vpop.f32.mrf.mxu0
        %v1752 = vadd.f32 %v1557, %v1751
        %v1753 = vpop.f32.mrf.mxu0
        %v1754 = vadd.f32 %v1559, %v1753
        %1755 = vmatmul.bf16.gmra.mxu0 %v1674
        %v1756 = vpop.f32.mrf.mxu0
        %v1757 = vadd.f32 %v1561, %v1756
        %v1758 = vpop.f32.mrf.mxu0
        %v1759 = vadd.f32 %v1563, %v1758
        %1760 = vmatmul.bf16.gmra.mxu0 %v1677
        %v1761 = vpop.f32.mrf.mxu0
        %v1762 = vadd.f32 %v1565, %v1761
        %v1763 = vpop.f32.mrf.mxu0
        %v1764 = vadd.f32 %v1567, %v1763
        %1765 = vmatmul.bf16.gmra.mxu0 %v1680
        %v1766 = vpop.f32.mrf.mxu0
        %v1767 = vadd.f32 %v1569, %v1766
        %v1768 = vpop.f32.mrf.mxu0
        %v1769 = vadd.f32 %v1571, %v1768
        %1770 = vmatmul.bf16.gmra.mxu0 %v1683
        %v1771 = vpop.f32.mrf.mxu0
        %v1772 = vadd.f32 %v1573, %v1771
        %v1773 = vpop.f32.mrf.mxu0
        %v1774 = vadd.f32 %v1575, %v1773
        %1775 = vmatmul.bf16.gmra.mxu0 %v1686
        %v1776 = vpop.f32.mrf.mxu0
        %v1777 = vadd.f32 %v1577, %v1776
        %v1778 = vpop.f32.mrf.mxu0
        %v1779 = vadd.f32 %v1579, %v1778
        %1780 = vmatmul.bf16.gmra.mxu0 %v1689
        %v1781 = vpop.f32.mrf.mxu0
        %v1782 = vadd.f32 %v1581, %v1781
        %v1783 = vpop.f32.mrf.mxu0
        %v1784 = vadd.f32 %v1583, %v1783
        %1785 = vmatmul.bf16.gmra.mxu0 %v1692
        %v1786 = vpop.f32.mrf.mxu0
        %v1787 = vadd.f32 %v1585, %v1786
        %v1788 = vpop.f32.mrf.mxu0
        %v1789 = vadd.f32 %v1587, %v1788
        %1790 = vdwg.mxu0
        %1791 = vmatpush.bf16.xpose.msra.mxu0 %v1740
        %1792 = vmatpush.bf16.xpose.msra.mxu0 %v1737
        %1793 = vmatpush.bf16.xpose.msra.mxu0 %v1734
        %1794 = vmatpush.bf16.xpose.msra.mxu0 %v1731
        %1795 = vmatpush.bf16.xpose.msra.mxu0 %v1728
        %1796 = vmatpush.bf16.xpose.msra.mxu0 %v1725
        %1797 = vmatpush.bf16.xpose.msra.mxu0 %v1722
        %1798 = vmatpush.bf16.xpose.msra.mxu0 %v1719
        %1799 = vmatmul.bf16.gmra.mxu0 %v1671
        %v1800 = vpop.f32.mrf.mxu0
        %v1801 = vadd.f32 %v1558, %v1800
        %v1802 = vpop.f32.mrf.mxu0
        %v1803 = vadd.f32 %v1560, %v1802
        %1804 = vmatmul.bf16.gmra.mxu0 %v1674
        %v1805 = vpop.f32.mrf.mxu0
        %v1806 = vadd.f32 %v1562, %v1805
        %v1807 = vpop.f32.mrf.mxu0
        %v1808 = vadd.f32 %v1564, %v1807
        %1809 = vmatmul.bf16.gmra.mxu0 %v1677
        %v1810 = vpop.f32.mrf.mxu0
        %v1811 = vadd.f32 %v1566, %v1810
        %v1812 = vpop.f32.mrf.mxu0
        %v1813 = vadd.f32 %v1568, %v1812
        %1814 = vmatmul.bf16.gmra.mxu0 %v1680
        %v1815 = vpop.f32.mrf.mxu0
        %v1816 = vadd.f32 %v1570, %v1815
        %v1817 = vpop.f32.mrf.mxu0
        %v1818 = vadd.f32 %v1572, %v1817
        %1819 = vmatmul.bf16.gmra.mxu0 %v1683
        %v1820 = vpop.f32.mrf.mxu0
        %v1821 = vadd.f32 %v1574, %v1820
        %v1822 = vpop.f32.mrf.mxu0
        %v1823 = vadd.f32 %v1576, %v1822
        %1824 = vmatmul.bf16.gmra.mxu0 %v1686
        %v1825 = vpop.f32.mrf.mxu0
        %v1826 = vadd.f32 %v1578, %v1825
        %v1827 = vpop.f32.mrf.mxu0
        %v1828 = vadd.f32 %v1580, %v1827
        %1829 = vmatmul.bf16.gmra.mxu0 %v1689
        %v1830 = vpop.f32.mrf.mxu0
        %v1831 = vadd.f32 %v1582, %v1830
        %v1832 = vpop.f32.mrf.mxu0
        %v1833 = vadd.f32 %v1584, %v1832
        %1834 = vmatmul.bf16.gmra.mxu0 %v1692
        %v1835 = vpop.f32.mrf.mxu0
        %v1836 = vadd.f32 %v1586, %v1835
        %v1837 = vpop.f32.mrf.mxu0
        %v1838 = vadd.f32 %v1588, %v1837
        %1839 = vdwg.mxu0
        %v1840 = vmax.f32 %v1752, %v1801
        %1841 = vmax.xlane.f32.xlu0 %v1840
        %v1842 = vpop.xlane.xlu0 %1841
        %v1843 = vmax.f32 %v1754, %v1803
        %1844 = vmax.xlane.f32.xlu0 %v1843
        %v1845 = vpop.xlane.xlu0 %1844
        %v1846 = vmax.f32 %v1757, %v1806
        %1847 = vmax.xlane.f32.xlu0 %v1846
        %v1848 = vpop.xlane.xlu0 %1847
        %v1849 = vmax.f32 %v1759, %v1808
        %1850 = vmax.xlane.f32.xlu0 %v1849
        %v1851 = vpop.xlane.xlu0 %1850
        %v1852 = vmax.f32 %v1762, %v1811
        %1853 = vmax.xlane.f32.xlu0 %v1852
        %v1854 = vpop.xlane.xlu0 %1853
        %v1855 = vmax.f32 %v1764, %v1813
        %1856 = vmax.xlane.f32.xlu0 %v1855
        %v1857 = vpop.xlane.xlu0 %1856
        %v1858 = vmax.f32 %v1767, %v1816
        %1859 = vmax.xlane.f32.xlu0 %v1858
        %v1860 = vpop.xlane.xlu0 %1859
        %v1861 = vmax.f32 %v1769, %v1818
        %1862 = vmax.xlane.f32.xlu0 %v1861
        %v1863 = vpop.xlane.xlu0 %1862
        %v1864 = vmax.f32 %v1772, %v1821
        %1865 = vmax.xlane.f32.xlu0 %v1864
        %v1866 = vpop.xlane.xlu0 %1865
        %v1867 = vmax.f32 %v1774, %v1823
        %1868 = vmax.xlane.f32.xlu0 %v1867
        %v1869 = vpop.xlane.xlu0 %1868
        %v1870 = vmax.f32 %v1777, %v1826
        %1871 = vmax.xlane.f32.xlu0 %v1870
        %v1872 = vpop.xlane.xlu0 %1871
        %v1873 = vmax.f32 %v1779, %v1828
        %1874 = vmax.xlane.f32.xlu0 %v1873
        %v1875 = vpop.xlane.xlu0 %1874
        %v1876 = vmax.f32 %v1782, %v1831
        %1877 = vmax.xlane.f32.xlu0 %v1876
        %v1878 = vpop.xlane.xlu0 %1877
        %v1879 = vmax.f32 %v1784, %v1833
        %1880 = vmax.xlane.f32.xlu0 %v1879
        %v1881 = vpop.xlane.xlu0 %1880
        %v1882 = vmax.f32 %v1787, %v1836
        %1883 = vmax.xlane.f32.xlu0 %v1882
        %v1884 = vpop.xlane.xlu0 %1883
        %v1885 = vmax.f32 %v1789, %v1838
        %1886 = vmax.xlane.f32.xlu0 %v1885
        %v1887 = vpop.xlane.xlu0 %1886
        %v1888 = vsub.f32 %v1752, %v1842
        %v1889 = vsub.f32 %v1801, %v1842
        %v1890 = vsub.f32 %v1754, %v1845
        %v1891 = vsub.f32 %v1803, %v1845
        %v1892 = vsub.f32 %v1757, %v1848
        %v1893 = vsub.f32 %v1806, %v1848
        %v1894 = vsub.f32 %v1759, %v1851
        %v1895 = vsub.f32 %v1808, %v1851
        %v1896 = vsub.f32 %v1762, %v1854
        %v1897 = vsub.f32 %v1811, %v1854
        %v1898 = vsub.f32 %v1764, %v1857
        %v1899 = vsub.f32 %v1813, %v1857
        %v1900 = vsub.f32 %v1767, %v1860
        %v1901 = vsub.f32 %v1816, %v1860
        %v1902 = vsub.f32 %v1769, %v1863
        %v1903 = vsub.f32 %v1818, %v1863
        %v1904 = vsub.f32 %v1772, %v1866
        %v1905 = vsub.f32 %v1821, %v1866
        %v1906 = vsub.f32 %v1774, %v1869
        %v1907 = vsub.f32 %v1823, %v1869
        %v1908 = vsub.f32 %v1777, %v1872
        %v1909 = vsub.f32 %v1826, %v1872
        %v1910 = vsub.f32 %v1779, %v1875
        %v1911 = vsub.f32 %v1828, %v1875
        %v1912 = vsub.f32 %v1782, %v1878
        %v1913 = vsub.f32 %v1831, %v1878
        %v1914 = vsub.f32 %v1784, %v1881
        %v1915 = vsub.f32 %v1833, %v1881
        %v1916 = vsub.f32 %v1787, %v1884
        %v1917 = vsub.f32 %v1836, %v1884
        %v1918 = vsub.f32 %v1789, %v1887
        %v1919 = vsub.f32 %v1838, %v1887
        %v1920 = vmul.f32 %v1888, 1.442695
        %v1921 = vpow.pop %v1920
        %v1922 = vmul.f32 %v1889, 1.442695
        %v1923 = vpow.pop %v1922
        %v1924 = vmul.f32 %v1890, 1.442695
        %v1925 = vpow.pop %v1924
        %v1926 = vmul.f32 %v1891, 1.442695
        %v1927 = vpow.pop %v1926
        %v1928 = vmul.f32 %v1892, 1.442695
        %v1929 = vpow.pop %v1928
        %v1930 = vmul.f32 %v1893, 1.442695
        %v1931 = vpow.pop %v1930
        %v1932 = vmul.f32 %v1894, 1.442695
        %v1933 = vpow.pop %v1932
        %v1934 = vmul.f32 %v1895, 1.442695
        %v1935 = vpow.pop %v1934
        %v1936 = vmul.f32 %v1896, 1.442695
        %v1937 = vpow.pop %v1936
        %v1938 = vmul.f32 %v1897, 1.442695
        %v1939 = vpow.pop %v1938
        %v1940 = vmul.f32 %v1898, 1.442695
        %v1941 = vpow.pop %v1940
        %v1942 = vmul.f32 %v1899, 1.442695
        %v1943 = vpow.pop %v1942
        %v1944 = vmul.f32 %v1900, 1.442695
        %v1945 = vpow.pop %v1944
        %v1946 = vmul.f32 %v1901, 1.442695
        %v1947 = vpow.pop %v1946
        %v1948 = vmul.f32 %v1902, 1.442695
        %v1949 = vpow.pop %v1948
        %v1950 = vmul.f32 %v1903, 1.442695
        %v1951 = vpow.pop %v1950
        %v1952 = vmul.f32 %v1904, 1.442695
        %v1953 = vpow.pop %v1952
        %v1954 = vmul.f32 %v1905, 1.442695
        %v1955 = vpow.pop %v1954
        %v1956 = vmul.f32 %v1906, 1.442695
        %v1957 = vpow.pop %v1956
        %v1958 = vmul.f32 %v1907, 1.442695
        %v1959 = vpow.pop %v1958
        %v1960 = vmul.f32 %v1908, 1.442695
        %v1961 = vpow.pop %v1960
        %v1962 = vmul.f32 %v1909, 1.442695
        %v1963 = vpow.pop %v1962
        %v1964 = vmul.f32 %v1910, 1.442695
        %v1965 = vpow.pop %v1964
        %v1966 = vmul.f32 %v1911, 1.442695
        %v1967 = vpow.pop %v1966
        %v1968 = vmul.f32 %v1912, 1.442695
        %v1969 = vpow.pop %v1968
        %v1970 = vmul.f32 %v1913, 1.442695
        %v1971 = vpow.pop %v1970
        %v1972 = vmul.f32 %v1914, 1.442695
        %v1973 = vpow.pop %v1972
        %v1974 = vmul.f32 %v1915, 1.442695
        %v1975 = vpow.pop %v1974
        %v1976 = vmul.f32 %v1916, 1.442695
        %v1977 = vpow.pop %v1976
        %v1978 = vmul.f32 %v1917, 1.442695
        %v1979 = vpow.pop %v1978
        %v1980 = vmul.f32 %v1918, 1.442695
        %v1981 = vpow.pop %v1980
        %v1982 = vmul.f32 %v1919, 1.442695
        %v1983 = vpow.pop %v1982
        %v1984 = vadd.f32 %v1921, %v1923
        %1985 = vadd.xlane.f32.xlu0 %v1984
        %v1986 = vpop.xlane.xlu0 %1985
        %v1987 = vadd.f32 %v1925, %v1927
        %1988 = vadd.xlane.f32.xlu0 %v1987
        %v1989 = vpop.xlane.xlu0 %1988
        %v1990 = vadd.f32 %v1929, %v1931
        %1991 = vadd.xlane.f32.xlu0 %v1990
        %v1992 = vpop.xlane.xlu0 %1991
        %v1993 = vadd.f32 %v1933, %v1935
        %1994 = vadd.xlane.f32.xlu0 %v1993
        %v1995 = vpop.xlane.xlu0 %1994
        %v1996 = vadd.f32 %v1937, %v1939
        %1997 = vadd.xlane.f32.xlu0 %v1996
        %v1998 = vpop.xlane.xlu0 %1997
        %v1999 = vadd.f32 %v1941, %v1943
        %2000 = vadd.xlane.f32.xlu0 %v1999
        %v2001 = vpop.xlane.xlu0 %2000
        %v2002 = vadd.f32 %v1945, %v1947
        %2003 = vadd.xlane.f32.xlu0 %v2002
        %v2004 = vpop.xlane.xlu0 %2003
        %v2005 = vadd.f32 %v1949, %v1951
        %2006 = vadd.xlane.f32.xlu0 %v2005
        %v2007 = vpop.xlane.xlu0 %2006
        %v2008 = vadd.f32 %v1953, %v1955
        %2009 = vadd.xlane.f32.xlu0 %v2008
        %v2010 = vpop.xlane.xlu0 %2009
        %v2011 = vadd.f32 %v1957, %v1959
        %2012 = vadd.xlane.f32.xlu0 %v2011
        %v2013 = vpop.xlane.xlu0 %2012
        %v2014 = vadd.f32 %v1961, %v1963
        %2015 = vadd.xlane.f32.xlu0 %v2014
        %v2016 = vpop.xlane.xlu0 %2015
        %v2017 = vadd.f32 %v1965, %v1967
        %2018 = vadd.xlane.f32.xlu0 %v2017
        %v2019 = vpop.xlane.xlu0 %2018
        %v2020 = vadd.f32 %v1969, %v1971
        %2021 = vadd.xlane.f32.xlu0 %v2020
        %v2022 = vpop.xlane.xlu0 %2021
        %v2023 = vadd.f32 %v1973, %v1975
        %2024 = vadd.xlane.f32.xlu0 %v2023
        %v2025 = vpop.xlane.xlu0 %2024
        %v2026 = vadd.f32 %v1977, %v1979
        %2027 = vadd.xlane.f32.xlu0 %v2026
        %v2028 = vpop.xlane.xlu0 %2027
        %v2029 = vadd.f32 %v1981, %v1983
        %2030 = vadd.xlane.f32.xlu0 %v2029
        %v2031 = vpop.xlane.xlu0 %2030
        %v2032 = vrcp.pop %v1986
        %v2033 = vrcp.pop %v1989
        %v2034 = vrcp.pop %v1992
        %v2035 = vrcp.pop %v1995
        %v2036 = vrcp.pop %v1998
        %v2037 = vrcp.pop %v2001
        %v2038 = vrcp.pop %v2004
        %v2039 = vrcp.pop %v2007
        %v2040 = vrcp.pop %v2010
        %v2041 = vrcp.pop %v2013
        %v2042 = vrcp.pop %v2016
        %v2043 = vrcp.pop %v2019
        %v2044 = vrcp.pop %v2022
        %v2045 = vrcp.pop %v2025
        %v2046 = vrcp.pop %v2028
        %v2047 = vrcp.pop %v2031
        %v2048 = vmul.f32 %v1921, %v2032
        %v2049 = vmul.f32 %v1923, %v2032
        %v2050 = vmul.f32 %v1925, %v2033
        %v2051 = vmul.f32 %v1927, %v2033
        %v2052 = vmul.f32 %v1929, %v2034
        %v2053 = vmul.f32 %v1931, %v2034
        %v2054 = vmul.f32 %v1933, %v2035
        %v2055 = vmul.f32 %v1935, %v2035
        %v2056 = vmul.f32 %v1937, %v2036
        %v2057 = vmul.f32 %v1939, %v2036
        %v2058 = vmul.f32 %v1941, %v2037
        %v2059 = vmul.f32 %v1943, %v2037
        %v2060 = vmul.f32 %v1945, %v2038
        %v2061 = vmul.f32 %v1947, %v2038
        %v2062 = vmul.f32 %v1949, %v2039
        %v2063 = vmul.f32 %v1951, %v2039
        %v2064 = vmul.f32 %v1953, %v2040
        %v2065 = vmul.f32 %v1955, %v2040
        %v2066 = vmul.f32 %v1957, %v2041
        %v2067 = vmul.f32 %v1959, %v2041
        %v2068 = vmul.f32 %v1961, %v2042
        %v2069 = vmul.f32 %v1963, %v2042
        %v2070 = vmul.f32 %v1965, %v2043
        %v2071 = vmul.f32 %v1967, %v2043
        %v2072 = vmul.f32 %v1969, %v2044
        %v2073 = vmul.f32 %v1971, %v2044
        %v2074 = vmul.f32 %v1973, %v2045
        %v2075 = vmul.f32 %v1975, %v2045
        %v2076 = vmul.f32 %v1977, %v2046
        %v2077 = vmul.f32 %v1979, %v2046
        %v2078 = vmul.f32 %v1981, %v2047
        %v2079 = vmul.f32 %v1983, %v2047
        %v2080 = vpack.c.bf16 %v2050, %v2048
        %v2081 = vpack.c.bf16 %v2051, %v2049
        %v2082 = vpack.c.bf16 %v2054, %v2052
        %v2083 = vpack.c.bf16 %v2055, %v2053
        %v2084 = vpack.c.bf16 %v2058, %v2056
        %v2085 = vpack.c.bf16 %v2059, %v2057
        %v2086 = vpack.c.bf16 %v2062, %v2060
        %v2087 = vpack.c.bf16 %v2063, %v2061
        %v2088 = vpack.c.bf16 %v2066, %v2064
        %v2089 = vpack.c.bf16 %v2067, %v2065
        %v2090 = vpack.c.bf16 %v2070, %v2068
        %v2091 = vpack.c.bf16 %v2071, %v2069
        %v2092 = vpack.c.bf16 %v2074, %v2072
        %v2093 = vpack.c.bf16 %v2075, %v2073
        %v2094 = vpack.c.bf16 %v2078, %v2076
        %v2095 = vpack.c.bf16 %v2079, %v2077
        %v2096 = vld [vmem:[#allocation3] sm:$0xf]
        %v2097 = vld [vmem:[#allocation3 + $0x4] sm:$0xf]
        %v2098 = vld [vmem:[#allocation3 + $0x8] sm:$0xf]
        %v2099 = vld [vmem:[#allocation3 + $0xc] sm:$0xf]
        %v2100 = vld [vmem:[#allocation3 + $0x10] sm:$0xf]
        %v2101 = vld [vmem:[#allocation3 + $0x14] sm:$0xf]
        %v2102 = vld [vmem:[#allocation3 + $0x18] sm:$0xf]
        %v2103 = vld [vmem:[#allocation3 + $0x1c] sm:$0xf]
        %v2104 = vld [vmem:[#allocation3 + $0x20] sm:$0xf]
        %v2105 = vld [vmem:[#allocation3 + $0x24] sm:$0xf]
        %v2106 = vld [vmem:[#allocation3 + $0x28] sm:$0xf]
        %v2107 = vld [vmem:[#allocation3 + $0x2c] sm:$0xf]
        %v2108 = vld [vmem:[#allocation3 + $0x30] sm:$0xf]
        %v2109 = vld [vmem:[#allocation3 + $0x34] sm:$0xf]
        %v2110 = vld [vmem:[#allocation3 + $0x38] sm:$0xf]
        %v2111 = vld [vmem:[#allocation3 + $0x3c] sm:$0xf]
        %v2112 = vld [vmem:[#allocation3 + $0x40] sm:$0xf]
        %v2113 = vld [vmem:[#allocation3 + $0x44] sm:$0xf]
        %v2114 = vld [vmem:[#allocation3 + $0x48] sm:$0xf]
        %v2115 = vld [vmem:[#allocation3 + $0x4c] sm:$0xf]
        %v2116 = vld [vmem:[#allocation3 + $0x50] sm:$0xf]
        %v2117 = vld [vmem:[#allocation3 + $0x54] sm:$0xf]
        %v2118 = vld [vmem:[#allocation3 + $0x58] sm:$0xf]
        %v2119 = vld [vmem:[#allocation3 + $0x5c] sm:$0xf]
        %v2120 = vld [vmem:[#allocation3 + $0x60] sm:$0xf]
        %v2121 = vld [vmem:[#allocation3 + $0x64] sm:$0xf]
        %v2122 = vld [vmem:[#allocation3 + $0x68] sm:$0xf]
        %v2123 = vld [vmem:[#allocation3 + $0x6c] sm:$0xf]
        %v2124 = vld [vmem:[#allocation3 + $0x70] sm:$0xf]
        %v2125 = vld [vmem:[#allocation3 + $0x74] sm:$0xf]
        %v2126 = vld [vmem:[#allocation3 + $0x78] sm:$0xf]
        %v2127 = vld [vmem:[#allocation3 + $0x7c] sm:$0xf]
        %v2160 = vunpack.c.l.b16 %v2096
        %v2161 = vunpack.c.l.b16 %v2097
        %v2162 = vunpack.c.l.b16 %v2098
        %v2163 = vunpack.c.l.b16 %v2099
        %v2164 = vunpack.c.l.b16 %v2100
        %v2165 = vunpack.c.l.b16 %v2101
        %v2166 = vunpack.c.l.b16 %v2102
        %v2167 = vunpack.c.l.b16 %v2103
        %v2168 = vunpack.c.l.b16 %v2104
        %v2169 = vunpack.c.l.b16 %v2105
        %v2170 = vunpack.c.l.b16 %v2106
        %v2171 = vunpack.c.l.b16 %v2107
        %v2172 = vunpack.c.l.b16 %v2108
        %v2173 = vunpack.c.l.b16 %v2109
        %v2174 = vunpack.c.l.b16 %v2110
        %v2175 = vunpack.c.l.b16 %v2111
        %v2176 = vunpack.c.l.b16 %v2112
        %v2177 = vunpack.c.l.b16 %v2113
        %v2178 = vunpack.c.l.b16 %v2114
        %v2179 = vunpack.c.l.b16 %v2115
        %v2180 = vunpack.c.l.b16 %v2116
        %v2181 = vunpack.c.l.b16 %v2117
        %v2182 = vunpack.c.l.b16 %v2118
        %v2183 = vunpack.c.l.b16 %v2119
        %v2184 = vunpack.c.l.b16 %v2120
        %v2185 = vunpack.c.l.b16 %v2121
        %v2186 = vunpack.c.l.b16 %v2122
        %v2187 = vunpack.c.l.b16 %v2123
        %v2188 = vunpack.c.l.b16 %v2124
        %v2189 = vunpack.c.l.b16 %v2125
        %v2190 = vunpack.c.l.b16 %v2126
        %v2191 = vunpack.c.l.b16 %v2127
        %v2192 = vpack.c.b16 %v2161, %v2160
        %v2193 = vpack.c.b16 %v2163, %v2162
        %v2194 = vpack.c.b16 %v2165, %v2164
        %v2195 = vpack.c.b16 %v2167, %v2166
        %v2196 = vpack.c.b16 %v2169, %v2168
        %v2197 = vpack.c.b16 %v2171, %v2170
        %v2198 = vpack.c.b16 %v2173, %v2172
        %v2199 = vpack.c.b16 %v2175, %v2174
        %v2200 = vpack.c.b16 %v2177, %v2176
        %v2201 = vpack.c.b16 %v2179, %v2178
        %v2202 = vpack.c.b16 %v2181, %v2180
        %v2203 = vpack.c.b16 %v2183, %v2182
        %v2204 = vpack.c.b16 %v2185, %v2184
        %v2205 = vpack.c.b16 %v2187, %v2186
        %v2206 = vpack.c.b16 %v2189, %v2188
        %v2207 = vpack.c.b16 %v2191, %v2190
        %2224 = vmatpush.bf16.msra.mxu0 %v2199
        %2225 = vmatpush.bf16.msra.mxu0 %v2198
        %2226 = vmatpush.bf16.msra.mxu0 %v2197
        %2227 = vmatpush.bf16.msra.mxu0 %v2196
        %2228 = vmatpush.bf16.msra.mxu0 %v2195
        %2229 = vmatpush.bf16.msra.mxu0 %v2194
        %2230 = vmatpush.bf16.msra.mxu0 %v2193
        %2231 = vmatpush.bf16.msra.mxu0 %v2192
        %2232 = vmatmul.bf16.gmra.mxu0 %v2080
        %v2233 = vpop.f32.mrf.mxu0
        %v2234 = vadd.f32 0.0, %v2233
        %v2235 = vpop.f32.mrf.mxu0
        %v2236 = vadd.f32 0.0, %v2235
        %2237 = vmatmul.bf16.gmra.mxu0 %v2082
        %v2238 = vpop.f32.mrf.mxu0
        %v2239 = vadd.f32 0.0, %v2238
        %v2240 = vpop.f32.mrf.mxu0
        %v2241 = vadd.f32 0.0, %v2240
        %2242 = vmatmul.bf16.gmra.mxu0 %v2084
        %v2243 = vpop.f32.mrf.mxu0
        %v2244 = vadd.f32 0.0, %v2243
        %v2245 = vpop.f32.mrf.mxu0
        %v2246 = vadd.f32 0.0, %v2245
        %2247 = vmatmul.bf16.gmra.mxu0 %v2086
        %v2248 = vpop.f32.mrf.mxu0
        %v2249 = vadd.f32 0.0, %v2248
        %v2250 = vpop.f32.mrf.mxu0
        %v2251 = vadd.f32 0.0, %v2250
        %2252 = vmatmul.bf16.gmra.mxu0 %v2088
        %v2253 = vpop.f32.mrf.mxu0
        %v2254 = vadd.f32 0.0, %v2253
        %v2255 = vpop.f32.mrf.mxu0
        %v2256 = vadd.f32 0.0, %v2255
        %2257 = vmatmul.bf16.gmra.mxu0 %v2090
        %v2258 = vpop.f32.mrf.mxu0
        %v2259 = vadd.f32 0.0, %v2258
        %v2260 = vpop.f32.mrf.mxu0
        %v2261 = vadd.f32 0.0, %v2260
        %2262 = vmatmul.bf16.gmra.mxu0 %v2092
        %v2263 = vpop.f32.mrf.mxu0
        %v2264 = vadd.f32 0.0, %v2263
        %v2265 = vpop.f32.mrf.mxu0
        %v2266 = vadd.f32 0.0, %v2265
        %2267 = vmatmul.bf16.gmra.mxu0 %v2094
        %v2268 = vpop.f32.mrf.mxu0
        %v2269 = vadd.f32 0.0, %v2268
        %v2270 = vpop.f32.mrf.mxu0
        %v2271 = vadd.f32 0.0, %v2270
        %2272 = vdwg.mxu0
        %2273 = vmatpush.bf16.msra.mxu0 %v2207
        %2274 = vmatpush.bf16.msra.mxu0 %v2206
        %2275 = vmatpush.bf16.msra.mxu0 %v2205
        %2276 = vmatpush.bf16.msra.mxu0 %v2204
        %2277 = vmatpush.bf16.msra.mxu0 %v2203
        %2278 = vmatpush.bf16.msra.mxu0 %v2202
        %2279 = vmatpush.bf16.msra.mxu0 %v2201
        %2280 = vmatpush.bf16.msra.mxu0 %v2200
        %2281 = vmatmul.bf16.gmra.mxu0 %v2081
        %v2282 = vpop.f32.mrf.mxu0
        %v2283 = vadd.f32 %v2234, %v2282
        %v2284 = vpop.f32.mrf.mxu0
        %v2285 = vadd.f32 %v2236, %v2284
        %2286 = vmatmul.bf16.gmra.mxu0 %v2083
        %v2287 = vpop.f32.mrf.mxu0
        %v2288 = vadd.f32 %v2239, %v2287
        %v2289 = vpop.f32.mrf.mxu0
        %v2290 = vadd.f32 %v2241, %v2289
        %2291 = vmatmul.bf16.gmra.mxu0 %v2085
        %v2292 = vpop.f32.mrf.mxu0
        %v2293 = vadd.f32 %v2244, %v2292
        %v2294 = vpop.f32.mrf.mxu0
        %v2295 = vadd.f32 %v2246, %v2294
        %2296 = vmatmul.bf16.gmra.mxu0 %v2087
        %v2297 = vpop.f32.mrf.mxu0
        %v2298 = vadd.f32 %v2249, %v2297
        %v2299 = vpop.f32.mrf.mxu0
        %v2300 = vadd.f32 %v2251, %v2299
        %2301 = vmatmul.bf16.gmra.mxu0 %v2089
        %v2302 = vpop.f32.mrf.mxu0
        %v2303 = vadd.f32 %v2254, %v2302
        %v2304 = vpop.f32.mrf.mxu0
        %v2305 = vadd.f32 %v2256, %v2304
        %2306 = vmatmul.bf16.gmra.mxu0 %v2091
        %v2307 = vpop.f32.mrf.mxu0
        %v2308 = vadd.f32 %v2259, %v2307
        %v2309 = vpop.f32.mrf.mxu0
        %v2310 = vadd.f32 %v2261, %v2309
        %2311 = vmatmul.bf16.gmra.mxu0 %v2093
        %v2312 = vpop.f32.mrf.mxu0
        %v2313 = vadd.f32 %v2264, %v2312
        %v2314 = vpop.f32.mrf.mxu0
        %v2315 = vadd.f32 %v2266, %v2314
        %2316 = vmatmul.bf16.gmra.mxu0 %v2095
        %v2317 = vpop.f32.mrf.mxu0
        %v2318 = vadd.f32 %v2269, %v2317
        %v2319 = vpop.f32.mrf.mxu0
        %v2320 = vadd.f32 %v2271, %v2319
        %2321 = vdwg.mxu0
        %2322 = vst.msk [vmem:[%s266] sm:$0xff] %vm1669, %v2283
        %2323 = vst.msk [vmem:[%s266 + $0x8] sm:$0xff] %vm1669, %v2285
        %2324 = vst.msk [vmem:[%s266 + $0x10] sm:$0xff] %vm1669, %v2288
        %2325 = vst.msk [vmem:[%s266 + $0x18] sm:$0xff] %vm1669, %v2290
        %2326 = vst.msk [vmem:[%s266 + $0x20] sm:$0xff] %vm1669, %v2293
        %2327 = vst.msk [vmem:[%s266 + $0x28] sm:$0xff] %vm1669, %v2295
        %2328 = vst.msk [vmem:[%s266 + $0x30] sm:$0xff] %vm1669, %v2298
        %2329 = vst.msk [vmem:[%s266 + $0x38] sm:$0xff] %vm1669, %v2300
        %2330 = vst.msk [vmem:[%s266 + $0x40] sm:$0xff] %vm1669, %v2303
        %2331 = vst.msk [vmem:[%s266 + $0x48] sm:$0xff] %vm1669, %v2305
        %2332 = vst.msk [vmem:[%s266 + $0x50] sm:$0xff] %vm1669, %v2308
        %2333 = vst.msk [vmem:[%s266 + $0x58] sm:$0xff] %vm1669, %v2310
        %2334 = vst.msk [vmem:[%s266 + $0x60] sm:$0xff] %vm1669, %v2313
        %2335 = vst.msk [vmem:[%s266 + $0x68] sm:$0xff] %vm1669, %v2315
        %2336 = vst.msk [vmem:[%s266 + $0x70] sm:$0xff] %vm1669, %v2318
        %2337 = vst.msk [vmem:[%s266 + $0x78] sm:$0xff] %vm1669, %v2320
        %s2338 = smul.u32 16, %s23
        %p2339 = scmp.lt.s32.totalorder %s22, 1
        %s2340 = scalar_select %p2339, %s22, 1
        %p2341 = scmp.lt.s32.totalorder %s2338, 31
        %s2342 = scalar_select %p2341, %s2338, 31
        %s2343 = smul.addr %s2340, 32
        %s2344 = sadd.s32 %s2342, %s2343
        %s2345 = smul.addr %s2344, 8
        %s2346 = scalar_lea.vmem %s4, %s2345
        // Predicated region
        $region45: #{head_forward.1} parent=35 // pred_check
          %p2347 = pneg %p144
        $region46: #{head_forward.1} parent=35 // pred_check_branch
          %2349 = sbr.rel (%p2347) target = $region48
        $region47: #{head_forward.1} parent=35 // pred_region
          %s2350 = smul.u32 16, %s23
        $region48: #{head_forward.1} parent=35 // pred_fallthru
          _
      $region36: #{head_forward.1} parent=5 // pred_fallthru
        _
      %p2351 = scmp.le.s32.totalorder 2, %s13
      // Predicated region
      $region49: #{head_forward.1} parent=5 // pred_check
        %p2352 = pneg %p2351
      $region50: #{head_forward.1} parent=5 // pred_check_branch
        %2354 = sbr.rel (%p2352) target = $region52
      $region51: #{head_forward.1} parent=5 // pred_region
        %s2355 = ssub.s32 %s13, 2
        // Predicated region
        $region53: #{head_forward.1} parent=51 // pred_check
          %p2356 = pneg %p150
        $region54: #{head_forward.1} parent=51 // pred_check_branch
          %2358 = sbr.rel (%p2356) target = $region56
        $region55: #{head_forward.1} parent=51 // pred_region
          %s2359 = smul.u32 16, %s25
          %p2360 = scmp.lt.s32.totalorder %s24, 1
          %s2361 = scalar_select %p2360, %s24, 1
          %p2362 = scmp.lt.s32.totalorder %s2359, 31
          %s2363 = scalar_select %p2362, %s2359, 31
          %s2364 = smul.addr %s2361, 32
          %s2365 = sadd.s32 %s2363, %s2364
          %s2366 = smul.addr %s2365, 8
          %s2367 = scalar_lea.vmem %s4, %s2366
        $region56: #{head_forward.1} parent=51 // pred_fallthru
          _
      $region52: #{head_forward.1} parent=5 // pred_fallthru
        _
    $region6: #{head_forward.1} parent=1 // loop_footer
      %s17 = sadd.s32 1, %s13
    $region7: #{head_forward.1} parent=1 // loop_footer_branch
      %12 = sbr.rel target = $region3
    $region8: #{head_forward.1} parent=1 // loop_exit
      _
    %2368 = vsyncpa [#allocation5], 1
    %s2369 = scalar_lea.sflag [#allocation5], 1
    %2370 = vsyncpa %s2369, 1

</llo_original>
